<compile_context>
chip_gen: v5e
topology: v5e:2x2
jax: 0.10.0
libtpu: 0.0.40
codegen_flags: <defaults>
</compile_context>

<pallas_src>
import math
from collections import OrderedDict

import numpy as np
import jax
import jax.numpy as jnp
from jax import lax
from jax.experimental import pallas as pl
from jax.experimental.pallas import tpu as pltpu  # noqa: F401  (TPU backend)

# ---------------- configuration (small, consistent with the module) ----------------
SEQ_LEN = 16
PRED_LEN = 8
ENC_IN = 4              # channels
WINDOW_SIZE = [2, 2]
D_MODEL = 8
HYPER_NUM = [4, 3, 2]   # one entry per scale (len(window_size)+1)
K_TOP = 2
ALPHA_HG = 3.0
BETA = 0.5
GAMMA = 4.2
NEG_SLOPE = 0.2
BATCH = 2
INTER_IN = 80           # inter_tran input width in the reference model


def get_mask(input_size, window_size):
    all_size = [input_size]
    for i in range(len(window_size)):
        all_size.append(int(math.floor(all_size[i] / window_size[i])))
    return all_size


ALL_SIZE = get_mask(SEQ_LEN, WINDOW_SIZE)   # [16, 8, 4]
MS_LENGTH = sum(ALL_SIZE)                   # 28
N_SCALES = len(HYPER_NUM)


# =====================================================================
# Host-side (compile-time) hypergraph construction — numpy, data independent
# =====================================================================
def build_hypergraph(node_emb, hyper_emb):
    a = node_emb @ hyper_emb.T                       # (N, M)
    r = np.maximum(ALPHA_HG * a, 0.0)
    e = np.exp(r - r.max(axis=1, keepdims=True))
    adj = e / e.sum(axis=1, keepdims=True)           # softmax over M (dim=1)
    N, M = adj.shape
    kk = min(M, K_TOP)
    mask = np.zeros_like(adj)
    top_idx = np.argsort(-adj, axis=1, kind="stable")[:, :kk]
    for n in range(N):
        mask[n, top_idx[n]] = 1.0
    adj = adj * mask
    adj = (adj > BETA).astype(np.int64)
    keep = adj.any(axis=0)
    adj = adj[:, keep]
    node_list, edge_list = [], []
    for col in range(adj.shape[1]):
        nodes = np.nonzero(adj[:, col])[0]
        if len(nodes) > 0:
            node_list.append(nodes)
            edge_list.append(np.full(len(nodes), col, dtype=np.int64))
    n_idx = np.concatenate(node_list).astype(np.int32)
    m_idx = np.concatenate(edge_list).astype(np.int32)
    assert len(n_idx) > 0
    return n_idx, m_idx


def build_all_hypergraphs():
    graphs = []
    for i, M in enumerate(HYPER_NUM):
        N = ALL_SIZE[i]
        # Deterministic structured embeddings (nn.Embedding stand-in) that yield
        # a non-empty hypergraph through the softmax/topk/threshold pipeline.
        node_emb = np.zeros((N, D_MODEL), np.float32)
        node_emb[np.arange(N), np.arange(N) % D_MODEL] = 2.0
        hyper_emb = np.zeros((M, D_MODEL), np.float32)
        hyper_emb[np.arange(M), np.arange(M) % D_MODEL] = 2.0
        graphs.append(build_hypergraph(node_emb, hyper_emb))
    return graphs


# =====================================================================
# Parameters (deterministic init — identical RNG usage to the prior version)
# =====================================================================
def init_params():
    C, L, P, Ms = ENC_IN, SEQ_LEN, PRED_LEN, MS_LENGTH
    key = jax.random.PRNGKey(42)
    ks = jax.random.split(key, 12)

    def glorot(k, shape):
        fan_in, fan_out = shape[0], shape[-1]
        lim = math.sqrt(6.0 / (fan_in + fan_out))
        return jax.random.uniform(k, shape, jnp.float32, -lim, lim)

    hw_keys = jax.random.split(ks[0], N_SCALES)
    ha_keys = jax.random.split(ks[1], N_SCALES)
    params = {
        'hy_w':   [glorot(hw_keys[i], (C, C)) for i in range(N_SCALES)],
        'hy_att': [glorot(ha_keys[i], (2 * C,)) for i in range(N_SCALES)],
        'attn_wq': glorot(ks[2], (C, C)), 'attn_bq': jnp.zeros((C,), jnp.float32),
        'attn_wk': glorot(ks[3], (C, C)), 'attn_bk': jnp.zeros((C,), jnp.float32),
        'attn_wv': glorot(ks[4], (C, C)), 'attn_bv': jnp.zeros((C,), jnp.float32),
        'lin_w':  glorot(ks[5], (P, L)),  'lin_b':  jnp.zeros((P,), jnp.float32),
        'out_w':  jnp.ones((P, Ms), jnp.float32) / Ms,   # 1/Ms_length * ones
        'out_b':  jnp.zeros((P,), jnp.float32),
        'inter_w': glorot(ks[6], (P, INTER_IN)), 'inter_b': jnp.zeros((P,), jnp.float32),
        'tran_w': glorot(ks[7], (P, P)),  'tran_b': jnp.zeros((P,), jnp.float32),
    }
    return params


# =====================================================================
# Host-side folding of every static x static product + slab packing
# =====================================================================
def _rup8(n):
    return ((n + 7) // 8) * 8


def _blockdiag(mats):
    rows = sum(m.shape[0] for m in mats)
    cols = sum(m.shape[1] for m in mats)
    out = np.zeros((rows, cols), np.float32)
    r = c = 0
    for m in mats:
        out[r:r + m.shape[0], c:c + m.shape[1]] = m
        r += m.shape[0]
        c += m.shape[1]
    return out


def build_constant_slab(p, hypergraphs):
    C, L, P, B = ENC_IN, SEQ_LEN, PRED_LEN, BATCH
    BC = B * C

    # --- CSCM stand-in: window-average down-sampling chain (TODO above) ---
    chains = [np.eye(L, dtype=np.float32)]
    for lvl, w in enumerate(WINDOW_SIZE):
        n_in, n_out = ALL_SIZE[lvl], ALL_SIZE[lvl + 1]
        D = np.zeros((n_out, n_in), np.float32)
        for r in range(n_out):
            D[r, r * w:(r + 1) * w] = 1.0 / w
        chains.append((D @ chains[-1]).astype(np.float32))

    colN_off = np.concatenate([[0], np.cumsum(ALL_SIZE)]).astype(int)
    wout = np.asarray(p['out_w'], np.float32)

    E_list, MU_list = [], []
    GC, KGC, HC, Pm_l, KmB_l, WoutD_l = [], [], [], [], [], []
    att1_l, att2_l = [], []
    for i, (n_idx, m_idx) in enumerate(hypergraphs):
        N = ALL_SIZE[i]
        E = len(n_idx)
        Mu = int(m_idx.max()) + 1
        E_list.append(E)
        MU_list.append(Mu)
        Gn = np.zeros((E, N), np.float32); Gn[np.arange(E), n_idx] = 1.0   # gather nodes
        Sm = np.zeros((Mu, E), np.float32); Sm[m_idx, np.arange(E)] = 1.0  # sum per edge
        Sn = Gn.T.copy()                       # (N, E)  scatter-add to nodes
        Km = Sm.T @ Sm                         # (E, E)  same-hyperedge indicator
        Pm = Gn @ Sn                           # (E, E)  same-node indicator
        HT = Sm @ Gn                           # (Mu, N) incidence^T
        deg_node = Gn.sum(axis=0)              # (N,)
        deg_edge = Sm.sum(axis=1)              # (Mu,)
        inv_deg_edge = np.where(deg_edge > 0, 1.0 / np.maximum(deg_edge, 1.0), 0.0)
        Bg = inv_deg_edge[m_idx]               # (E,)  B[m_idx]
        Dg = deg_node[n_idx]                   # (E,)  D[n_idx]

        GC.append((Gn @ chains[i]).astype(np.float32))            # x_i operator
        KGC.append((Km @ Gn @ chains[i]).astype(np.float32))      # x_j operator
        HC.append((HT @ chains[i]).astype(np.float32))            # edge-sum operator
        Pm_l.append(Pm.astype(np.float32))
        KmB_l.append((Km * Bg.reshape(1, E)).astype(np.float32))  # B folded into Km
        att = np.asarray(p['hy_att'][i], np.float32)               # (2C,)
        att1_l.append(np.tile(att[:C], B))                         # (BC,)
        att2_l.append(np.tile(att[C:], B))
        # out_tran column block folded through the node scatter + node degree D
        WoutD_l.append(((wout[:, colN_off[i]:colN_off[i + 1]] @ Sn)
                        * Dg.reshape(1, E)).astype(np.float32))

    E_TOT = int(sum(E_list))
    MU_TOT = int(sum(MU_list))
    assert MU_TOT <= INTER_IN
    e_off = np.concatenate([[0], np.cumsum(E_list)]).astype(int)
    m_off = np.concatenate([[0], np.cumsum(MU_list)]).astype(int)

    # --- one wide block-diagonal "BigOp": pyramid + gathers, all scales at once ---
    XI_OFF = 0
    XJ_OFF = _rup8(E_TOT)
    ES_OFF = XJ_OFF + _rup8(E_TOT)
    SH_OFF = ES_OFF + _rup8(MU_TOT)
    BIG_ROWS = SH_OFF + _rup8(MU_TOT)
    BIG_COLS = (N_SCALES + 1) * L
    BigOp = np.zeros((BIG_ROWS, BIG_COLS), np.float32)
    for i in range(N_SCALES):
        c0 = i * L
        BigOp[XI_OFF + e_off[i]:XI_OFF + e_off[i + 1], c0:c0 + L] = GC[i]
        BigOp[XJ_OFF + e_off[i]:XJ_OFF + e_off[i + 1], c0:c0 + L] = KGC[i]
        BigOp[ES_OFF + m_off[i]:ES_OFF + m_off[i + 1], c0:c0 + L] = HC[i]
        BigOp[SH_OFF + m_off[i]:SH_OFF + m_off[i + 1], N_SCALES * L:] = HC[i]  # pre-weight

    # per-scale HypergraphConv weights, block-diag over the two batch lane-blocks
    Wcat = np.concatenate(
        [np.kron(np.eye(B, dtype=np.float32), np.asarray(p['hy_w'][i], np.float32))
         for i in range(N_SCALES)], axis=1)                        # (BC, N_SCALES*BC)

    Att1 = np.zeros((E_TOT, BC), np.float32)
    Att2 = np.zeros((E_TOT, BC), np.float32)
    for i in range(N_SCALES):
        Att1[e_off[i]:e_off[i + 1], :] = att1_l[i]
        Att2[e_off[i]:e_off[i + 1], :] = att2_l[i]

    BlockSum = np.kron(np.eye(B, dtype=np.float32), np.ones((C, C), np.float32))  # (BC,BC)
    Pm_all = _blockdiag(Pm_l)                                       # (E_TOT, E_TOT)
    KmB_all = _blockdiag(KmB_l)                                     # (E_TOT, E_TOT)

    wqkv_cat = np.concatenate([np.asarray(p['attn_wq'], np.float32),
                               np.asarray(p['attn_wk'], np.float32),
                               np.asarray(p['attn_wv'], np.float32)], axis=1)   # (C, 3C)
    WqkvBD = np.kron(np.eye(B, dtype=np.float32), wqkv_cat)        # (BC, B*3C)
    Bqkv = np.tile(np.concatenate([np.asarray(p['attn_bq'], np.float32),
                                   np.asarray(p['attn_bk'], np.float32),
                                   np.asarray(p['attn_bv'], np.float32)]),
                   B).reshape(1, B * 3 * C)

    # fused head: Linear_Tran(Linear(xn) + out_tran(hyconv outs) + inter_tran(attn))
    WoutD = np.concatenate(WoutD_l, axis=1)                         # (P, E_TOT)
    Wint = np.asarray(p['inter_w'], np.float32)[:, :MU_TOT]         # pad-to-80 dropped (zeros)
    HeadW_pre = np.concatenate([np.asarray(p['lin_w'], np.float32), WoutD, Wint], axis=1)
    tran_w = np.asarray(p['tran_w'], np.float32)
    HeadW = (tran_w @ HeadW_pre).astype(np.float32)                 # (P, L+E_TOT+MU_TOT)
    bias_pre = (np.asarray(p['lin_b'], np.float32) + np.asarray(p['out_b'], np.float32)
                + np.asarray(p['inter_b'], np.float32))
    bias2 = tran_w @ bias_pre + np.asarray(p['tran_b'], np.float32)
    Bias2 = np.tile(bias2.reshape(P, 1), (1, BC)).astype(np.float32)

    # constraint-loss helpers
    SSel = np.zeros((N_SCALES, E_TOT), np.float32)                  # per-scale mean of (x_i-x_j)
    for i in range(N_SCALES):
        SSel[i, e_off[i]:e_off[i + 1]] = 1.0 / float(E_list[i] * B * C)
    Wpair = np.zeros((MU_TOT, MU_TOT), np.float32)                  # block mask * 1/(Mu+1)^2
    for i in range(N_SCALES):
        Wpair[m_off[i]:m_off[i + 1], m_off[i]:m_off[i + 1]] = 1.0 / float((MU_list[i] + 1) ** 2)
    EyeM = np.eye(MU_TOT, dtype=np.float32)

    mats = OrderedDict(
        wcat=Wcat, bigop=BigOp, att1=Att1, att2=Att2, bsum=BlockSum,
        pm=Pm_all, kmb=KmB_all, wqkv=WqkvBD, bqkv=Bqkv,
        headw=HeadW, bias2=Bias2, ssel=SSel, wpair=Wpair, eyem=EyeM)

    layout = {}
    off = 0
    for name, m in mats.items():
        layout[name] = (int(off), int(m.shape[0]), int(m.shape[1]))
        off += _rup8(int(m.shape[0]))
    slab = np.zeros((_rup8(off), 128), np.float32)                  # one lane-dense slab
    for name, m in mats.items():
        r0, nr, nc = layout[name]
        slab[r0:r0 + nr, :nc] = m

    meta = dict(layout=layout, E_TOT=E_TOT, MU_TOT=MU_TOT,
                XI_OFF=XI_OFF, XJ_OFF=XJ_OFF, ES_OFF=ES_OFF, SH_OFF=SH_OFF)
    return slab, meta


# =====================================================================
# The single fused Pallas kernel + jitted wrapper
# =====================================================================
def make_forward():
    params = init_params()
    params_np = jax.tree_util.tree_map(lambda a: np.asarray(a), params)
    hypergraphs = build_all_hypergraphs()
    slab_np, meta = build_constant_slab(params_np, hypergraphs)
    slab = jnp.asarray(slab_np)

    layout = meta['layout']
    E_TOT, MU_TOT = meta['E_TOT'], meta['MU_TOT']
    XI_OFF, XJ_OFF = meta['XI_OFF'], meta['XJ_OFF']
    ES_OFF, SH_OFF = meta['ES_OFF'], meta['SH_OFF']
    L, C, P, B = SEQ_LEN, ENC_IN, PRED_LEN, BATCH
    BC = B * C
    inv_sqrt_c = 1.0 / math.sqrt(float(C))

    def mm(a, b):
        return jnp.dot(a, b, preferred_element_type=jnp.float32)

    def kernel(x_ref, slab_ref, out_ref):
        def g(name):
            r0, nr, nc = layout[name]
            return slab_ref[r0:r0 + nr, 0:nc]

        # ---- series normalization (both batches live on the 8 lanes) ----
        X = x_ref[...]                                   # (L, B*C)
        mean = jnp.mean(X, axis=0, keepdims=True)        # (1, BC)
        xc = X - mean
        var = jnp.mean(xc * xc, axis=0, keepdims=True)   # unbiased=False
        std = jnp.sqrt(var + 1e-5)
        xn = xc / std                                    # (L, BC)

        # ---- one fused structure matmul: CSCM pyramid + hypergraph gathers ----
        zw = mm(xn, g('wcat'))                           # (L, N_SCALES*BC) per-scale xn@W
        rstack = jnp.concatenate(
            [zw[:, i * BC:(i + 1) * BC] for i in range(N_SCALES)] + [xn], axis=0)
        y = mm(g('bigop'), rstack)                       # (BIG_ROWS, BC)
        x_i = y[XI_OFF:XI_OFF + E_TOT]                   # (E, BC)  x1[n_idx]
        x_j = y[XJ_OFF:XJ_OFF + E_TOT]                   # (E, BC)  edge_sums[m_idx]
        es = y[ES_OFF:ES_OFF + MU_TOT]                   # (Mu, BC) post-weight edge sums
        sh = y[SH_OFF:SH_OFF + MU_TOT]                   # (Mu, BC) pre-weight edge sums

        # ---- hyperedge attention + per-node segment softmax (all scales at once) ----
        prod = x_i * g('att1') + x_j * g('att2')         # (E, BC)
        alp = mm(prod, g('bsum'))                        # (E, BC) per-batch channel sums
        alp = jnp.where(alp >= 0, alp, NEG_SLOPE * alp)  # leaky_relu
        # NOTE: a single global max is subtracted; the shift is constant within
        # every node group, so the per-node segment softmax is exact.
        m0 = jnp.max(alp, axis=0, keepdims=True)
        ealp = jnp.exp(alp - m0)
        denom = mm(g('pm'), ealp)                        # per-node sums gathered to edges
        alpha = ealp / (denom + 1e-16)
        # TODO(synk): F.dropout(alpha, p=0.1) skipped — deterministic eval semantics.

        # ---- two-step propagation (B folded into kmb, D folded into head weight) ----
        gath = mm(g('kmb'), alpha * x_i)                 # (E, BC) edge aggregates on edges
        msgf = alpha * gath                              # (E, BC)

        # ---- self attention over model-level hyperedge sums (per-batch softmax) ----
        qkv = mm(sh, g('wqkv')) + g('bqkv')              # (Mu, B*3C)
        attns = []
        for b in range(B):
            q = qkv[:, b * 3 * C:b * 3 * C + C]
            k = qkv[:, b * 3 * C + C:b * 3 * C + 2 * C]
            v = qkv[:, b * 3 * C + 2 * C:b * 3 * C + 3 * C]
            s = lax.dot_general(q, k, (((1,), (1,)), ((), ())),
                                preferred_element_type=jnp.float32) * inv_sqrt_c
            s = s - jnp.max(s, axis=-1, keepdims=True)
            e = jnp.exp(s)
            attns.append(mm(e / jnp.sum(e, axis=-1, keepdims=True), v))
        attn = jnp.concatenate(attns, axis=1)            # (Mu, BC)

        # ---- fused prediction head: Linear + out_tran + inter_tran + Linear_Tran ----
        stack = jnp.concatenate([xn, msgf, attn], axis=0)            # (L+E+Mu, BC)
        z = mm(g('headw'), stack) + g('bias2')                       # (P, BC)
        out_ref[0:P, :] = z * std + mean                             # de-normalize

        # ---- constraint loss ----
        diff = x_i - x_j
        ds = jnp.sum(mm(g('ssel'), diff), axis=1, keepdims=True)     # (scales, 1) means
        term1 = jnp.sum(jnp.abs(ds), axis=0, keepdims=True)          # (1, 1)

        eyem = g('eyem')
        li_sum = None
        for b in range(B):
            esb = es[:, b * C:(b + 1) * C]                           # (Mu, C)
            inner = lax.dot_general(esb, esb, (((1,), (1,)), ((), ())),
                                    preferred_element_type=jnp.float32)   # (Mu, Mu)
            dgm = inner * eyem
            n2c = jnp.sum(dgm, axis=1, keepdims=True)                # (Mu, 1) squared norms
            n2r = jnp.sum(dgm, axis=0, keepdims=True)                # (1, Mu)
            nprod = jnp.sqrt(n2c * n2r)
            dist = jnp.sqrt(jnp.maximum(n2c + n2r - 2.0 * inner, 0.0))
            # +1e-16 guards zero-norm edge sums (the reference would emit NaN there)
            a_p = inner / (nprod + 1e-16)
            li = a_p * dist + (1.0 - a_p) * jnp.maximum(GAMMA - dist, 0.0)
            li_sum = li if li_sum is None else li_sum + li
        li_mean = li_sum * (1.0 / float(B))                          # mean over batch, then abs
        lh = jnp.sum(jnp.sum(g('wpair') * jnp.abs(li_mean), axis=1, keepdims=True),
                     axis=0, keepdims=True)                          # (1, 1)
        out_ref[P:P + 1, :] = jnp.broadcast_to(jnp.abs(term1 + lh), (1, BC))

    def _forward(x, x_mark_enc=None):
        del x_mark_enc  # unused (as in the reference forward)
        assert x.shape == (B, L, C), x.shape
        xt = jnp.transpose(x.astype(jnp.float32), (1, 0, 2)).reshape(L, BC)
        packed = pl.pallas_call(
            kernel,
            out_shape=jax.ShapeDtypeStruct((P + 1, BC), jnp.float32),
        )(xt, slab)
        preds = packed[:P].reshape(P, B, C).transpose(1, 0, 2)       # (B, P, C)
        return preds, packed[P, 0]

    return jax.jit(_forward)


# =====================================================================
if __name__ == "__main__":
    key = jax.random.PRNGKey(0)
    kx, km = jax.random.split(key)
    x = jax.random.normal(kx, (BATCH, SEQ_LEN, ENC_IN), dtype=jnp.float32)
    x_mark_enc = jax.random.normal(km, (BATCH, SEQ_LEN, 4), dtype=jnp.float32)

    forward = make_forward()
    out, conloss = forward(x, x_mark_enc)
    out = jax.block_until_ready(out)
    conloss = jax.block_until_ready(conloss)

    assert out.shape == (BATCH, PRED_LEN, ENC_IN), out.shape
    assert bool(jnp.all(jnp.isfinite(out))) and bool(jnp.isfinite(conloss))
    print("KERNEL_OK")
</pallas_src>

<mosaic_0001>
module attributes {stable_mosaic.version = 11 : i64} {
  func.func @kernel(%arg0: memref<16x8xf32, #tpu.memory_space<vmem>>, %arg1: memref<216x128xf32, #tpu.memory_space<vmem>>, %arg2: memref<9x8xf32, #tpu.memory_space<vmem>>) attributes {dimension_semantics = [], scalar_prefetch = 0 : i64, scratch_operands = 0 : i64, tpu.core_type = #tpu.core_type<tc>} {
    %c0 = arith.constant 0 : index
    %c0_0 = arith.constant 0 : index
    %0 = vector.load %arg0[%c0, %c0_0] : memref<16x8xf32, #tpu.memory_space<vmem>>, vector<16x8xf32>
    %cst = arith.constant dense<0.000000e+00> : vector<8xf32>
    %1 = vector.multi_reduction <add>, %0, %cst [0] : vector<16x8xf32> to vector<8xf32>
    %2 = vector.shape_cast %1 : vector<8xf32> to vector<1x8xf32>
    %cst_1 = arith.constant 1.600000e+01 : f32
    %3 = vector.broadcast %cst_1 : f32 to vector<1x8xf32>
    %4 = arith.divf %2, %3 : vector<1x8xf32>
    %5 = vector.broadcast %4 : vector<1x8xf32> to vector<16x8xf32>
    %6 = arith.subf %0, %5 : vector<16x8xf32>
    %7 = arith.mulf %6, %6 : vector<16x8xf32>
    %cst_2 = arith.constant dense<0.000000e+00> : vector<8xf32>
    %8 = vector.multi_reduction <add>, %7, %cst_2 [0] : vector<16x8xf32> to vector<8xf32>
    %9 = vector.shape_cast %8 : vector<8xf32> to vector<1x8xf32>
    %cst_3 = arith.constant 1.600000e+01 : f32
    %10 = vector.broadcast %cst_3 : f32 to vector<1x8xf32>
    %11 = arith.divf %9, %10 : vector<1x8xf32>
    %cst_4 = arith.constant 9.99999974E-6 : f32
    %12 = vector.broadcast %cst_4 : f32 to vector<1x8xf32>
    %13 = arith.addf %11, %12 : vector<1x8xf32>
    %14 = math.sqrt %13 : vector<1x8xf32>
    %15 = vector.broadcast %14 : vector<1x8xf32> to vector<16x8xf32>
    %16 = arith.divf %6, %15 : vector<16x8xf32>
    %c0_5 = arith.constant 0 : index
    %c0_6 = arith.constant 0 : index
    %17 = vector.load %arg1[%c0_5, %c0_6] : memref<216x128xf32, #tpu.memory_space<vmem>>, vector<8x24xf32>
    %cst_7 = arith.constant dense<0.000000e+00> : vector<16x24xf32>
    %18 = tpu.matmul %16, %17, %cst_7 {dimension_numbers = #tpu.dot_dimension_numbers<[1], [0], [0], [1], [0, 0, 1, 1], [], []>} : vector<16x8xf32>, vector<8x24xf32>, vector<16x24xf32> -> vector<16x24xf32>
    %19 = vector.extract_strided_slice %18 {offsets = [0, 0], sizes = [16, 8], strides = [1, 1]} : vector<16x24xf32> to vector<16x8xf32>
    %20 = vector.extract_strided_slice %18 {offsets = [0, 8], sizes = [16, 8], strides = [1, 1]} : vector<16x24xf32> to vector<16x8xf32>
    %21 = vector.extract_strided_slice %18 {offsets = [0, 16], sizes = [16, 8], strides = [1, 1]} : vector<16x24xf32> to vector<16x8xf32>
    %22 = tpu.concatenate %19, %20, %21, %16 in 0 : vector<16x8xf32>, vector<16x8xf32>, vector<16x8xf32>, vector<16x8xf32> -> vector<64x8xf32>
    %c8 = arith.constant 8 : index
    %c0_8 = arith.constant 0 : index
    %23 = vector.load %arg1[%c8, %c0_8] : memref<216x128xf32, #tpu.memory_space<vmem>>, vector<64x64xf32>
    %cst_9 = arith.constant dense<0.000000e+00> : vector<64x8xf32>
    %24 = tpu.matmul %23, %22, %cst_9 {dimension_numbers = #tpu.dot_dimension_numbers<[1], [0], [0], [1], [0, 0, 1, 1], [], []>} : vector<64x64xf32>, vector<64x8xf32>, vector<64x8xf32> -> vector<64x8xf32>
    %25 = vector.extract_strided_slice %24 {offsets = [0, 0], sizes = [13, 8], strides = [1, 1]} : vector<64x8xf32> to vector<13x8xf32>
    %26 = vector.extract_strided_slice %24 {offsets = [16, 0], sizes = [13, 8], strides = [1, 1]} : vector<64x8xf32> to vector<13x8xf32>
    %27 = vector.extract_strided_slice %24 {offsets = [32, 0], sizes = [9, 8], strides = [1, 1]} : vector<64x8xf32> to vector<9x8xf32>
    %28 = vector.extract_strided_slice %24 {offsets = [48, 0], sizes = [9, 8], strides = [1, 1]} : vector<64x8xf32> to vector<9x8xf32>
    %c72 = arith.constant 72 : index
    %c0_10 = arith.constant 0 : index
    %29 = vector.load %arg1[%c72, %c0_10] : memref<216x128xf32, #tpu.memory_space<vmem>>, vector<13x8xf32>
    %30 = arith.mulf %25, %29 : vector<13x8xf32>
    %c88 = arith.constant 88 : index
    %c0_11 = arith.constant 0 : index
    %31 = vector.load %arg1[%c88, %c0_11] : memref<216x128xf32, #tpu.memory_space<vmem>>, vector<13x8xf32>
    %32 = arith.mulf %26, %31 : vector<13x8xf32>
    %33 = arith.addf %30, %32 : vector<13x8xf32>
    %c104 = arith.constant 104 : index
    %c0_12 = arith.constant 0 : index
    %34 = vector.load %arg1[%c104, %c0_12] : memref<216x128xf32, #tpu.memory_space<vmem>>, vector<8x8xf32>
    %cst_13 = arith.constant dense<0.000000e+00> : vector<13x8xf32>
    %35 = tpu.matmul %33, %34, %cst_13 {dimension_numbers = #tpu.dot_dimension_numbers<[1], [0], [0], [1], [0, 0, 1, 1], [], []>} : vector<13x8xf32>, vector<8x8xf32>, vector<13x8xf32> -> vector<13x8xf32>
    %cst_14 = arith.constant 0.000000e+00 : f32
    %36 = vector.broadcast %cst_14 : f32 to vector<13x8xf32>
    %37 = arith.cmpf oge, %35, %36 : vector<13x8xf32>
    %cst_15 = arith.constant 2.000000e-01 : f32
    %38 = vector.broadcast %cst_15 : f32 to vector<13x8xf32>
    %39 = arith.mulf %38, %35 : vector<13x8xf32>
    %40 = arith.select %37, %35, %39 : vector<13x8xi1>, vector<13x8xf32>
    %cst_16 = arith.constant dense<0xFF800000> : vector<8xf32>
    %41 = vector.multi_reduction <maximumf>, %40, %cst_16 [0] : vector<13x8xf32> to vector<8xf32>
    %42 = vector.shape_cast %41 : vector<8xf32> to vector<1x8xf32>
    %43 = vector.broadcast %42 : vector<1x8xf32> to vector<13x8xf32>
    %44 = arith.subf %40, %43 : vector<13x8xf32>
    %45 = math.exp %44 : vector<13x8xf32>
    %c112 = arith.constant 112 : index
    %c0_17 = arith.constant 0 : index
    %46 = vector.load %arg1[%c112, %c0_17] : memref<216x128xf32, #tpu.memory_space<vmem>>, vector<13x13xf32>
    %cst_18 = arith.constant dense<0.000000e+00> : vector<13x8xf32>
    %47 = tpu.matmul %46, %45, %cst_18 {dimension_numbers = #tpu.dot_dimension_numbers<[1], [0], [0], [1], [0, 0, 1, 1], [], []>} : vector<13x13xf32>, vector<13x8xf32>, vector<13x8xf32> -> vector<13x8xf32>
    %cst_19 = arith.constant 1.000000e-16 : f32
    %48 = vector.broadcast %cst_19 : f32 to vector<13x8xf32>
    %49 = arith.addf %47, %48 : vector<13x8xf32>
    %50 = arith.divf %45, %49 : vector<13x8xf32>
    %c128 = arith.constant 128 : index
    %c0_20 = arith.constant 0 : index
    %51 = vector.load %arg1[%c128, %c0_20] : memref<216x128xf32, #tpu.memory_space<vmem>>, vector<13x13xf32>
    %52 = arith.mulf %50, %25 : vector<13x8xf32>
    %cst_21 = arith.constant dense<0.000000e+00> : vector<13x8xf32>
    %53 = tpu.matmul %51, %52, %cst_21 {dimension_numbers = #tpu.dot_dimension_numbers<[1], [0], [0], [1], [0, 0, 1, 1], [], []>} : vector<13x13xf32>, vector<13x8xf32>, vector<13x8xf32> -> vector<13x8xf32>
    %54 = arith.mulf %50, %53 : vector<13x8xf32>
    %c144 = arith.constant 144 : index
    %c0_22 = arith.constant 0 : index
    %55 = vector.load %arg1[%c144, %c0_22] : memref<216x128xf32, #tpu.memory_space<vmem>>, vector<8x24xf32>
    %cst_23 = arith.constant dense<0.000000e+00> : vector<9x24xf32>
    %56 = tpu.matmul %28, %55, %cst_23 {dimension_numbers = #tpu.dot_dimension_numbers<[1], [0], [0], [1], [0, 0, 1, 1], [], []>} : vector<9x8xf32>, vector<8x24xf32>, vector<9x24xf32> -> vector<9x24xf32>
    %c152 = arith.constant 152 : index
    %c0_24 = arith.constant 0 : index
    %57 = vector.load %arg1[%c152, %c0_24] : memref<216x128xf32, #tpu.memory_space<vmem>>, vector<1x24xf32>
    %58 = vector.broadcast %57 : vector<1x24xf32> to vector<9x24xf32>
    %59 = arith.addf %56, %58 : vector<9x24xf32>
    %60 = vector.extract_strided_slice %59 {offsets = [0, 0], sizes = [9, 4], strides = [1, 1]} : vector<9x24xf32> to vector<9x4xf32>
    %61 = vector.extract_strided_slice %59 {offsets = [0, 4], sizes = [9, 4], strides = [1, 1]} : vector<9x24xf32> to vector<9x4xf32>
    %62 = vector.extract_strided_slice %59 {offsets = [0, 8], sizes = [9, 4], strides = [1, 1]} : vector<9x24xf32> to vector<9x4xf32>
    %cst_25 = arith.constant dense<0.000000e+00> : vector<9x9xf32>
    %63 = tpu.matmul %60, %61, %cst_25 {dimension_numbers = #tpu.dot_dimension_numbers<[1], [1], [0], [0], [0, 0, 1, 0], [], []>} : vector<9x4xf32>, vector<9x4xf32>, vector<9x9xf32> -> vector<9x9xf32>
    %cst_26 = arith.constant 5.000000e-01 : f32
    %64 = vector.broadcast %cst_26 : f32 to vector<9x9xf32>
    %65 = arith.mulf %63, %64 : vector<9x9xf32>
    %cst_27 = arith.constant dense<0xFF800000> : vector<9xf32>
    %66 = vector.multi_reduction <maximumf>, %65, %cst_27 [1] : vector<9x9xf32> to vector<9xf32>
    %67 = vector.shape_cast %66 : vector<9xf32> to vector<9x1xf32>
    %68 = vector.broadcast %67 : vector<9x1xf32> to vector<9x9xf32>
    %69 = arith.subf %65, %68 : vector<9x9xf32>
    %70 = math.exp %69 : vector<9x9xf32>
    %cst_28 = arith.constant dense<0.000000e+00> : vector<9xf32>
    %71 = vector.multi_reduction <add>, %70, %cst_28 [1] : vector<9x9xf32> to vector<9xf32>
    %72 = vector.shape_cast %71 : vector<9xf32> to vector<9x1xf32>
    %73 = vector.broadcast %72 : vector<9x1xf32> to vector<9x9xf32>
    %74 = arith.divf %70, %73 : vector<9x9xf32>
    %cst_29 = arith.constant dense<0.000000e+00> : vector<9x4xf32>
    %75 = tpu.matmul %74, %62, %cst_29 {dimension_numbers = #tpu.dot_dimension_numbers<[1], [0], [0], [1], [0, 0, 1, 1], [], []>} : vector<9x9xf32>, vector<9x4xf32>, vector<9x4xf32> -> vector<9x4xf32>
    %76 = vector.extract_strided_slice %59 {offsets = [0, 12], sizes = [9, 4], strides = [1, 1]} : vector<9x24xf32> to vector<9x4xf32>
    %77 = vector.extract_strided_slice %59 {offsets = [0, 16], sizes = [9, 4], strides = [1, 1]} : vector<9x24xf32> to vector<9x4xf32>
    %78 = vector.extract_strided_slice %59 {offsets = [0, 20], sizes = [9, 4], strides = [1, 1]} : vector<9x24xf32> to vector<9x4xf32>
    %cst_30 = arith.constant dense<0.000000e+00> : vector<9x9xf32>
    %79 = tpu.matmul %76, %77, %cst_30 {dimension_numbers = #tpu.dot_dimension_numbers<[1], [1], [0], [0], [0, 0, 1, 0], [], []>} : vector<9x4xf32>, vector<9x4xf32>, vector<9x9xf32> -> vector<9x9xf32>
    %cst_31 = arith.constant 5.000000e-01 : f32
    %80 = vector.broadcast %cst_31 : f32 to vector<9x9xf32>
    %81 = arith.mulf %79, %80 : vector<9x9xf32>
    %cst_32 = arith.constant dense<0xFF800000> : vector<9xf32>
    %82 = vector.multi_reduction <maximumf>, %81, %cst_32 [1] : vector<9x9xf32> to vector<9xf32>
    %83 = vector.shape_cast %82 : vector<9xf32> to vector<9x1xf32>
    %84 = vector.broadcast %83 : vector<9x1xf32> to vector<9x9xf32>
    %85 = arith.subf %81, %84 : vector<9x9xf32>
    %86 = math.exp %85 : vector<9x9xf32>
    %cst_33 = arith.constant dense<0.000000e+00> : vector<9xf32>
    %87 = vector.multi_reduction <add>, %86, %cst_33 [1] : vector<9x9xf32> to vector<9xf32>
    %88 = vector.shape_cast %87 : vector<9xf32> to vector<9x1xf32>
    %89 = vector.broadcast %88 : vector<9x1xf32> to vector<9x9xf32>
    %90 = arith.divf %86, %89 : vector<9x9xf32>
    %cst_34 = arith.constant dense<0.000000e+00> : vector<9x4xf32>
    %91 = tpu.matmul %90, %78, %cst_34 {dimension_numbers = #tpu.dot_dimension_numbers<[1], [0], [0], [1], [0, 0, 1, 1], [], []>} : vector<9x9xf32>, vector<9x4xf32>, vector<9x4xf32> -> vector<9x4xf32>
    %92 = tpu.concatenate %75, %91 in 1 : vector<9x4xf32>, vector<9x4xf32> -> vector<9x8xf32>
    %93 = tpu.concatenate %16, %54, %92 in 0 : vector<16x8xf32>, vector<13x8xf32>, vector<9x8xf32> -> vector<38x8xf32>
    %c160 = arith.constant 160 : index
    %c0_35 = arith.constant 0 : index
    %94 = vector.load %arg1[%c160, %c0_35] : memref<216x128xf32, #tpu.memory_space<vmem>>, vector<8x38xf32>
    %cst_36 = arith.constant dense<0.000000e+00> : vector<8x8xf32>
    %95 = tpu.matmul %94, %93, %cst_36 {dimension_numbers = #tpu.dot_dimension_numbers<[1], [0], [0], [1], [0, 0, 1, 1], [], []>} : vector<8x38xf32>, vector<38x8xf32>, vector<8x8xf32> -> vector<8x8xf32>
    %c168 = arith.constant 168 : index
    %c0_37 = arith.constant 0 : index
    %96 = vector.load %arg1[%c168, %c0_37] : memref<216x128xf32, #tpu.memory_space<vmem>>, vector<8x8xf32>
    %97 = arith.addf %95, %96 : vector<8x8xf32>
    %98 = vector.broadcast %14 : vector<1x8xf32> to vector<8x8xf32>
    %99 = arith.mulf %97, %98 : vector<8x8xf32>
    %100 = vector.broadcast %4 : vector<1x8xf32> to vector<8x8xf32>
    %101 = arith.addf %99, %100 : vector<8x8xf32>
    %c0_38 = arith.constant 0 : index
    %c0_39 = arith.constant 0 : index
    %102 = vector.load %arg2[%c0_38, %c0_39] : memref<9x8xf32, #tpu.memory_space<vmem>>, vector<8x8xf32>
    tpu.vector_store %arg2[%c0_38, %c0_39], %101 {strides = array<i32>} : memref<9x8xf32, #tpu.memory_space<vmem>>, vector<8x8xf32>,
    %103 = arith.subf %25, %26 : vector<13x8xf32>
    %c176 = arith.constant 176 : index
    %c0_40 = arith.constant 0 : index
    %104 = vector.load %arg1[%c176, %c0_40] : memref<216x128xf32, #tpu.memory_space<vmem>>, vector<3x13xf32>
    %cst_41 = arith.constant dense<0.000000e+00> : vector<3x8xf32>
    %105 = tpu.matmul %104, %103, %cst_41 {dimension_numbers = #tpu.dot_dimension_numbers<[1], [0], [0], [1], [0, 0, 1, 1], [], []>} : vector<3x13xf32>, vector<13x8xf32>, vector<3x8xf32> -> vector<3x8xf32>
    %cst_42 = arith.constant dense<0.000000e+00> : vector<3xf32>
    %106 = vector.multi_reduction <add>, %105, %cst_42 [1] : vector<3x8xf32> to vector<3xf32>
    %107 = vector.shape_cast %106 : vector<3xf32> to vector<3x1xf32>
    %108 = math.absf %107 : vector<3x1xf32>
    %cst_43 = arith.constant dense<0.000000e+00> : vector<1xf32>
    %109 = vector.multi_reduction <add>, %108, %cst_43 [0] : vector<3x1xf32> to vector<1xf32>
    %110 = vector.shape_cast %109 : vector<1xf32> to vector<1x1xf32>
    %c200 = arith.constant 200 : index
    %c0_44 = arith.constant 0 : index
    %111 = vector.load %arg1[%c200, %c0_44] : memref<216x128xf32, #tpu.memory_space<vmem>>, vector<9x9xf32>
    %112 = vector.extract_strided_slice %27 {offsets = [0, 0], sizes = [9, 4], strides = [1, 1]} : vector<9x8xf32> to vector<9x4xf32>
    %cst_45 = arith.constant dense<0.000000e+00> : vector<9x9xf32>
    %113 = tpu.matmul %112, %112, %cst_45 {dimension_numbers = #tpu.dot_dimension_numbers<[1], [1], [0], [0], [0, 0, 1, 0], [], []>} : vector<9x4xf32>, vector<9x4xf32>, vector<9x9xf32> -> vector<9x9xf32>
    %114 = arith.mulf %113, %111 : vector<9x9xf32>
    %cst_46 = arith.constant dense<0.000000e+00> : vector<9xf32>
    %115 = vector.multi_reduction <add>, %114, %cst_46 [1] : vector<9x9xf32> to vector<9xf32>
    %116 = vector.shape_cast %115 : vector<9xf32> to vector<9x1xf32>
    %cst_47 = arith.constant dense<0.000000e+00> : vector<9xf32>
    %117 = vector.multi_reduction <add>, %114, %cst_47 [0] : vector<9x9xf32> to vector<9xf32>
    %118 = vector.shape_cast %117 : vector<9xf32> to vector<1x9xf32>
    %119 = vector.broadcast %116 : vector<9x1xf32> to vector<9x9xf32>
    %120 = vector.broadcast %118 : vector<1x9xf32> to vector<9x9xf32>
    %121 = arith.mulf %119, %120 : vector<9x9xf32>
    %122 = math.sqrt %121 : vector<9x9xf32>
    %123 = vector.broadcast %116 : vector<9x1xf32> to vector<9x9xf32>
    %124 = vector.broadcast %118 : vector<1x9xf32> to vector<9x9xf32>
    %125 = arith.addf %123, %124 : vector<9x9xf32>
    %cst_48 = arith.constant 2.000000e+00 : f32
    %126 = vector.broadcast %cst_48 : f32 to vector<9x9xf32>
    %127 = arith.mulf %126, %113 : vector<9x9xf32>
    %128 = arith.subf %125, %127 : vector<9x9xf32>
    %cst_49 = arith.constant 0.000000e+00 : f32
    %129 = vector.broadcast %cst_49 : f32 to vector<9x9xf32>
    %130 = arith.maximumf %128, %129 : vector<9x9xf32>
    %131 = math.sqrt %130 : vector<9x9xf32>
    %cst_50 = arith.constant 1.000000e-16 : f32
    %132 = vector.broadcast %cst_50 : f32 to vector<9x9xf32>
    %133 = arith.addf %122, %132 : vector<9x9xf32>
    %134 = arith.divf %113, %133 : vector<9x9xf32>
    %135 = arith.mulf %134, %131 : vector<9x9xf32>
    %cst_51 = arith.constant 1.000000e+00 : f32
    %136 = vector.broadcast %cst_51 : f32 to vector<9x9xf32>
    %137 = arith.subf %136, %134 : vector<9x9xf32>
    %cst_52 = arith.constant 4.200000e+00 : f32
    %138 = vector.broadcast %cst_52 : f32 to vector<9x9xf32>
    %139 = arith.subf %138, %131 : vector<9x9xf32>
    %cst_53 = arith.constant 0.000000e+00 : f32
    %140 = vector.broadcast %cst_53 : f32 to vector<9x9xf32>
    %141 = arith.maximumf %139, %140 : vector<9x9xf32>
    %142 = arith.mulf %137, %141 : vector<9x9xf32>
    %143 = arith.addf %135, %142 : vector<9x9xf32>
    %144 = vector.extract_strided_slice %27 {offsets = [0, 4], sizes = [9, 4], strides = [1, 1]} : vector<9x8xf32> to vector<9x4xf32>
    %cst_54 = arith.constant dense<0.000000e+00> : vector<9x9xf32>
    %145 = tpu.matmul %144, %144, %cst_54 {dimension_numbers = #tpu.dot_dimension_numbers<[1], [1], [0], [0], [0, 0, 1, 0], [], []>} : vector<9x4xf32>, vector<9x4xf32>, vector<9x9xf32> -> vector<9x9xf32>
    %146 = arith.mulf %145, %111 : vector<9x9xf32>
    %cst_55 = arith.constant dense<0.000000e+00> : vector<9xf32>
    %147 = vector.multi_reduction <add>, %146, %cst_55 [1] : vector<9x9xf32> to vector<9xf32>
    %148 = vector.shape_cast %147 : vector<9xf32> to vector<9x1xf32>
    %cst_56 = arith.constant dense<0.000000e+00> : vector<9xf32>
    %149 = vector.multi_reduction <add>, %146, %cst_56 [0] : vector<9x9xf32> to vector<9xf32>
    %150 = vector.shape_cast %149 : vector<9xf32> to vector<1x9xf32>
    %151 = vector.broadcast %148 : vector<9x1xf32> to vector<9x9xf32>
    %152 = vector.broadcast %150 : vector<1x9xf32> to vector<9x9xf32>
    %153 = arith.mulf %151, %152 : vector<9x9xf32>
    %154 = math.sqrt %153 : vector<9x9xf32>
    %155 = vector.broadcast %148 : vector<9x1xf32> to vector<9x9xf32>
    %156 = vector.broadcast %150 : vector<1x9xf32> to vector<9x9xf32>
    %157 = arith.addf %155, %156 : vector<9x9xf32>
    %cst_57 = arith.constant 2.000000e+00 : f32
    %158 = vector.broadcast %cst_57 : f32 to vector<9x9xf32>
    %159 = arith.mulf %158, %145 : vector<9x9xf32>
    %160 = arith.subf %157, %159 : vector<9x9xf32>
    %cst_58 = arith.constant 0.000000e+00 : f32
    %161 = vector.broadcast %cst_58 : f32 to vector<9x9xf32>
    %162 = arith.maximumf %160, %161 : vector<9x9xf32>
    %163 = math.sqrt %162 : vector<9x9xf32>
    %cst_59 = arith.constant 1.000000e-16 : f32
    %164 = vector.broadcast %cst_59 : f32 to vector<9x9xf32>
    %165 = arith.addf %154, %164 : vector<9x9xf32>
    %166 = arith.divf %145, %165 : vector<9x9xf32>
    %167 = arith.mulf %166, %163 : vector<9x9xf32>
    %cst_60 = arith.constant 1.000000e+00 : f32
    %168 = vector.broadcast %cst_60 : f32 to vector<9x9xf32>
    %169 = arith.subf %168, %166 : vector<9x9xf32>
    %cst_61 = arith.constant 4.200000e+00 : f32
    %170 = vector.broadcast %cst_61 : f32 to vector<9x9xf32>
    %171 = arith.subf %170, %163 : vector<9x9xf32>
    %cst_62 = arith.constant 0.000000e+00 : f32
    %172 = vector.broadcast %cst_62 : f32 to vector<9x9xf32>
    %173 = arith.maximumf %171, %172 : vector<9x9xf32>
    %174 = arith.mulf %169, %173 : vector<9x9xf32>
    %175 = arith.addf %167, %174 : vector<9x9xf32>
    %176 = arith.addf %143, %175 : vector<9x9xf32>
    %cst_63 = arith.constant 5.000000e-01 : f32
    %177 = vector.broadcast %cst_63 : f32 to vector<9x9xf32>
    %178 = arith.mulf %176, %177 : vector<9x9xf32>
    %c184 = arith.constant 184 : index
    %c0_64 = arith.constant 0 : index
    %179 = vector.load %arg1[%c184, %c0_64] : memref<216x128xf32, #tpu.memory_space<vmem>>, vector<9x9xf32>
    %180 = math.absf %178 : vector<9x9xf32>
    %181 = arith.mulf %179, %180 : vector<9x9xf32>
    %cst_65 = arith.constant dense<0.000000e+00> : vector<9xf32>
    %182 = vector.multi_reduction <add>, %181, %cst_65 [1] : vector<9x9xf32> to vector<9xf32>
    %183 = vector.shape_cast %182 : vector<9xf32> to vector<9x1xf32>
    %cst_66 = arith.constant dense<0.000000e+00> : vector<1xf32>
    %184 = vector.multi_reduction <add>, %183, %cst_66 [0] : vector<9x1xf32> to vector<1xf32>
    %185 = vector.shape_cast %184 : vector<1xf32> to vector<1x1xf32>
    %186 = arith.addf %110, %185 : vector<1x1xf32>
    %187 = math.absf %186 : vector<1x1xf32>
    %188 = vector.shape_cast %187 : vector<1x1xf32> to vector<1x1xf32>
    %189 = vector.broadcast %188 : vector<1x1xf32> to vector<1x8xf32>
    %c8_67 = arith.constant 8 : index
    %c0_68 = arith.constant 0 : index
    %190 = vector.load %arg2[%c8_67, %c0_68] : memref<9x8xf32, #tpu.memory_space<vmem>>, vector<1x8xf32>
    tpu.vector_store %arg2[%c8_67, %c0_68], %189 {strides = array<i32>} : memref<9x8xf32, #tpu.memory_space<vmem>>, vector<1x8xf32>,
    return
  }
}

</mosaic_0001>

<llo_original>
// kernel: _forward.1
$region0: #{_forward.1}
  #allocation0 [shape = 'u32[]', space=smem, size = 0x4, offset = 0x4, fixed_abs, tag = 'smem constant byte address 0x4 - core index']
  #allocation1 [shape = 'u32[72,128]{1,0:T(1,128)}', space=vmem, size = 0x9000, scoped, tag = 'internal scratch']
  %s0 = inlined_call_operand.vmem [shape: f32[16,8], index: 0, kind: input, shape index: {}]
  %s1 = inlined_call_operand.hbm [shape: f32[216,128], index: 1, kind: input, shape index: {}]
  %s2 = inlined_call_operand.vmem [shape: f32[9,8], index: 2, kind: output, shape index: {}]
  %s3 = sld [smem:[#allocation0]]
  $region22: #{_forward.1} parent=0
    _
  %s5 = ssub.s32 1, %s3
  %s6 = scalar_select 0, %s5, %s3
  $region1: #{_forward.1} parent=0
    #allocation2 [shape = 'u8[110592]{0}', space=vmem, size = 0x1b000, scoped, tag = 'input window, operand 1, single buffered']
    #allocation3 [shape = 's32[1]{0}', space=sflag, size = 0x4, scoped, tag = 'scoped memory for _forward.1']
    %7 = vsyncpa [#allocation3], 0
    // Predicated region
    $region2: #{_forward.1} parent=1 // pred_check
      _
    $region3: #{_forward.1} parent=1 // pred_check_branch
      %9 = sbr.rel (0) target = $region5
    $region4: #{_forward.1} parent=1 // pred_region
      _
    $region5: #{_forward.1} parent=1 // pred_fallthru
      _
    // Predicated region
    $region6: #{_forward.1} parent=1 // pred_check
      _
    $region7: #{_forward.1} parent=1 // pred_check_branch
      %11 = sbr.rel (0) target = $region9
    $region8: #{_forward.1} parent=1 // pred_region
      %13 = vsyncadd [#allocation3], 0
      %s14 = sshll.u32 %s1, 4
      %s15 = int_to_ptr.hbm [resolvable:$true] %s14
      %s16 = sshll.u32 [#allocation2], 4
      %s17 = int_to_ptr.vmem [resolvable:$true] %s16
      %22 = dma.hbm_to_vmem [thread:$0]  %s15, 3456, %s17, [#allocation3], 128, 128, 8
    $region9: #{_forward.1} parent=1 // pred_fallthru
      _
    // Predicated region
    $region10: #{_forward.1} parent=1 // pred_check
      _
    $region11: #{_forward.1} parent=1 // pred_check_branch
      %24 = sbr.rel (0) target = $region13
    $region12: #{_forward.1} parent=1 // pred_region
      %26 = dma.done [#allocation3], 3456
    $region13: #{_forward.1} parent=1 // pred_fallthru
      _
    %v27 = vld [vmem:[%s0] sm:$0xff]
    %v28 = vld [vmem:[%s0 + $0x8] sm:$0xff]
    %vm29 = vcmask 64512
    %v30 = vsel %vm29, %v27, 0.0
    %v31 = vsel %vm29, %v28, 0.0
    %v32 = vadd.f32 %v30, %v31
    %v33 = vrot.slane %v32, 4
    %v34 = vadd.f32 %v32, %v33
    %v35 = vrot.slane %v34, 2
    %v36 = vadd.f32 %v34, %v35
    %v37 = vrot.slane %v36, 1
    %v38 = vadd.f32 %v36, %v37
    %v39 = vrcp.pop 16.0
    %v40 = vmul.f32 16.0, %v39
    %v41 = vsub.f32 1.0, %v40
    %v42 = vmul.f32 %v39, %v41
    %v43 = vadd.f32 %v39, %v42
    %vm44 = vweird.f32 %v39
    %v45 = vsel %vm44, %v39, %v43
    %v46 = vmul.f32 %v38, %v45
    %v47 = vsub.f32 %v27, %v46
    %v48 = vsub.f32 %v28, %v46
    %v49 = vmul.f32 %v47, %v47
    %v50 = vmul.f32 %v48, %v48
    %v51 = vsel %vm29, %v49, 0.0
    %v52 = vsel %vm29, %v50, 0.0
    %v53 = vadd.f32 %v51, %v52
    %v54 = vrot.slane %v53, 4
    %v55 = vadd.f32 %v53, %v54
    %v56 = vrot.slane %v55, 2
    %v57 = vadd.f32 %v55, %v56
    %v58 = vrot.slane %v57, 1
    %v59 = vadd.f32 %v57, %v58
    %v60 = vmul.f32 %v59, %v45
    %v61 = vadd.f32 %v60, 1e-05
    %v62 = vrsqrt.pop %v61
    %v63 = vmul.f32 %v62, %v61
    %v64 = vmul.f32 %v63, %v62
    %v65 = vmul.f32 0.5, %v64
    %v66 = vsub.f32 1.5, %v65
    %v67 = vmul.f32 %v62, %v66
    %v68 = vmul.f32 %v61, %v67
    %vm69 = vcmp.eq.f32.partialorder %v61, inf
    %v70 = vsel %vm69, %v61, %v68
    %vm71 = vcmp.eq.f32.partialorder %v61, 0.0
    %v72 = vand.u32 %v61, 2147483648
    %v73 = vsel %vm71, %v72, %v70
    %v74 = vrcp.pop %v73
    %v75 = vmul.f32 %v73, %v74
    %v76 = vsub.f32 1.0, %v75
    %v77 = vmul.f32 %v74, %v76
    %v78 = vadd.f32 %v74, %v77
    %vm79 = vweird.f32 %v73
    %vm80 = vweird.f32 %v74
    %vm81 = vmor %vm79, %vm80
    %v82 = vsel %vm81, %v74, %v78
    %v83 = vand.u32 2147483647, %v73
    %vm84 = vcmp.eq.f32.partialorder %v83, 8.507059e+37
    %v85 = vand.u32 %v73, 2147483648
    %v86 = vor.u32 1.1754944e-38, %v85
    %v87 = vsel %vm84, %v86, %v82
    %v88 = vmul.f32 %v47, %v87
    %v89 = vmul.f32 %v48, %v87
    %v90 = vld [vmem:[#allocation2] sm:$0xff]
    %v92 = vsel %vm29, %v88, 0
    %v95 = vsel %vm29, %v89, 0
    %97 = vmatpush.msra.mxu0 0.0
    %98 = vmatpush.msra.mxu0 0.0
    %99 = vmatpush.msra.mxu0 0.0
    %100 = vmatpush.msra.mxu0 0.0
    %101 = vmatpush.msra.mxu0 0.0
    %102 = vmatpush.msra.mxu0 0.0
    %103 = vmatpush.msra.mxu0 0.0
    %104 = vmatpush.msra.mxu0 0.0
    %105 = vmatpush.msra.mxu0 0.0
    %106 = vmatpush.msra.mxu0 0.0
    %107 = vmatpush.msra.mxu0 0.0
    %108 = vmatpush.msra.mxu0 0.0
    %109 = vmatpush.msra.mxu0 0.0
    %110 = vmatpush.msra.mxu0 0.0
    %111 = vmatpush.msra.mxu0 0.0
    %112 = vmatpush.msra.mxu0 %v90
    %113 = vmatmul.f32.gmra.mxu0 %v92
    %v114 = vpop.f32.mrf.mxu0
    %v115 = vadd.f32 0.0, %v114
    %116 = vmatmul.f32.gmra.mxu0 %v95
    %v117 = vpop.f32.mrf.mxu0
    %v118 = vadd.f32 0.0, %v117
    %119 = vdwg.mxu0
    %122 = vrot.lane.b32.xlu0 %v115, 120
    %v123 = vpop.permute.xlu0 %122
    %124 = vrot.lane.b32.xlu0 %v118, 120
    %v125 = vpop.permute.xlu0 %124
    %128 = vrot.lane.b32.xlu0 %v115, 112
    %v129 = vpop.permute.xlu0 %128
    %130 = vrot.lane.b32.xlu0 %v118, 112
    %v131 = vpop.permute.xlu0 %130
    %v134 = vld [vmem:[#allocation2 + $0x8] sm:$0xff]
    %v135 = vld [vmem:[#allocation2 + $0x10] sm:$0xff]
    %v136 = vld [vmem:[#allocation2 + $0x18] sm:$0xff]
    %v137 = vld [vmem:[#allocation2 + $0x20] sm:$0xff]
    %v138 = vld [vmem:[#allocation2 + $0x28] sm:$0xff]
    %v139 = vld [vmem:[#allocation2 + $0x30] sm:$0xff]
    %v140 = vld [vmem:[#allocation2 + $0x38] sm:$0xff]
    %v141 = vld [vmem:[#allocation2 + $0x40] sm:$0xff]
    %vm142 = vcmask 523264
    %v144 = vsel %vm142, %v134, 0
    %v147 = vsel %vm142, %v135, 0
    %v150 = vsel %vm142, %v136, 0
    %v153 = vsel %vm142, %v137, 0
    %v156 = vsel %vm142, %v138, 0
    %v159 = vsel %vm142, %v139, 0
    %v162 = vsel %vm142, %v140, 0
    %v165 = vsel %vm142, %v141, 0
    %167 = vmatpush.msra.mxu0 0.0
    %168 = vmatpush.msra.mxu0 0.0
    %169 = vmatpush.msra.mxu0 0.0
    %170 = vmatpush.msra.mxu0 0.0
    %171 = vmatpush.msra.mxu0 0.0
    %172 = vmatpush.msra.mxu0 0.0
    %173 = vmatpush.msra.mxu0 0.0
    %174 = vmatpush.msra.mxu0 0.0
    %175 = vmatpush.msra.mxu0 %v89
    %176 = vmatpush.msra.mxu0 %v88
    %177 = vmatpush.msra.mxu0 %v131
    %178 = vmatpush.msra.mxu0 %v129
    %179 = vmatpush.msra.mxu0 %v125
    %180 = vmatpush.msra.mxu0 %v123
    %181 = vmatpush.msra.mxu0 %v118
    %182 = vmatpush.msra.mxu0 %v115
    %183 = vmatmul.f32.gmra.mxu0 %v144
    %v184 = vpop.f32.mrf.mxu0
    %v185 = vadd.f32 0.0, %v184
    %186 = vmatmul.f32.gmra.mxu0 %v147
    %v187 = vpop.f32.mrf.mxu0
    %v188 = vadd.f32 0.0, %v187
    %189 = vmatmul.f32.gmra.mxu0 %v150
    %v190 = vpop.f32.mrf.mxu0
    %v191 = vadd.f32 0.0, %v190
    %192 = vmatmul.f32.gmra.mxu0 %v153
    %v193 = vpop.f32.mrf.mxu0
    %v194 = vadd.f32 0.0, %v193
    %195 = vmatmul.f32.gmra.mxu0 %v156
    %v196 = vpop.f32.mrf.mxu0
    %v197 = vadd.f32 0.0, %v196
    %198 = vmatmul.f32.gmra.mxu0 %v159
    %v199 = vpop.f32.mrf.mxu0
    %v200 = vadd.f32 0.0, %v199
    %201 = vmatmul.f32.gmra.mxu0 %v162
    %v202 = vpop.f32.mrf.mxu0
    %v203 = vadd.f32 0.0, %v202
    %204 = vmatmul.f32.gmra.mxu0 %v165
    %v205 = vpop.f32.mrf.mxu0
    %v206 = vadd.f32 0.0, %v205
    %207 = vdwg.mxu0
    %v208 = vld [vmem:[#allocation2 + $0x48] sm:$0xff]
    %v209 = vld [vmem:[#allocation2 + $0x50] sm:$0x1f]
    %v210 = vmul.f32 %v185, %v208
    %v211 = vmul.f32 %v188, %v209
    %v212 = vld [vmem:[#allocation2 + $0x58] sm:$0xff]
    %v213 = vld [vmem:[#allocation2 + $0x60] sm:$0x1f]
    %v214 = vmul.f32 %v191, %v212
    %v215 = vmul.f32 %v194, %v213
    %v216 = vadd.f32 %v210, %v214
    %v217 = vadd.f32 %v211, %v215
    %v218 = vld [vmem:[#allocation2 + $0x68] sm:$0xff]
    %v220 = vsel %vm29, %v216, 0
    %v223 = vsel %vm29, %v217, 0
    %225 = vmatpush.msra.mxu0 0.0
    %226 = vmatpush.msra.mxu0 0.0
    %227 = vmatpush.msra.mxu0 0.0
    %228 = vmatpush.msra.mxu0 0.0
    %229 = vmatpush.msra.mxu0 0.0
    %230 = vmatpush.msra.mxu0 0.0
    %231 = vmatpush.msra.mxu0 0.0
    %232 = vmatpush.msra.mxu0 0.0
    %233 = vmatpush.msra.mxu0 0.0
    %234 = vmatpush.msra.mxu0 0.0
    %235 = vmatpush.msra.mxu0 0.0
    %236 = vmatpush.msra.mxu0 0.0
    %237 = vmatpush.msra.mxu0 0.0
    %238 = vmatpush.msra.mxu0 0.0
    %239 = vmatpush.msra.mxu0 0.0
    %240 = vmatpush.msra.mxu0 %v218
    %241 = vmatmul.f32.gmra.mxu0 %v220
    %v242 = vpop.f32.mrf.mxu0
    %v243 = vadd.f32 0.0, %v242
    %244 = vmatmul.f32.gmra.mxu0 %v223
    %v245 = vpop.f32.mrf.mxu0
    %v246 = vadd.f32 0.0, %v245
    %247 = vdwg.mxu0
    %vm248 = vcmp.ge.f32.partialorder %v243, 0.0
    %vm249 = vcmp.ge.f32.partialorder %v246, 0.0
    %v250 = vmul.f32 %v243, 0.2
    %v251 = vmul.f32 %v246, 0.2
    %v252 = vsel %vm248, %v243, %v250
    %v253 = vsel %vm249, %v246, %v251
    %v254 = vsel %vm29, %v252, -inf
    %vm255 = vcmask 61440
    %v256 = vsel %vm255, %v253, -inf
    %v257 = vmax.f32 %v254, %v256
    %v258 = vrot.slane %v257, 4
    %v259 = vmax.f32 %v257, %v258
    %v260 = vrot.slane %v259, 2
    %v261 = vmax.f32 %v259, %v260
    %v262 = vrot.slane %v261, 1
    %v263 = vmax.f32 %v261, %v262
    %v264 = vsub.f32 %v252, %v263
    %v265 = vsub.f32 %v253, %v263
    %v266 = vmul.f32 %v264, 1.442695
    %v267 = vpow.pop %v266
    %v268 = vmul.f32 %v265, 1.442695
    %v269 = vpow.pop %v268
    %v270 = vld [vmem:[#allocation2 + $0x70] sm:$0xff]
    %v271 = vld [vmem:[#allocation2 + $0x78] sm:$0x1f]
    %vm272 = vcmask 105472
    %v274 = vsel %vm272, %v270, 0
    %v277 = vsel %vm272, %v271, 0
    %vm279 = vcmask 1044480
    %v281 = vsel %vm279, %v269, 0
    %283 = vmatpush.msra.mxu0 0.0
    %284 = vmatpush.msra.mxu0 0.0
    %285 = vmatpush.msra.mxu0 0.0
    %286 = vmatpush.msra.mxu0 0.0
    %287 = vmatpush.msra.mxu0 0.0
    %288 = vmatpush.msra.mxu0 0.0
    %289 = vmatpush.msra.mxu0 0.0
    %290 = vmatpush.msra.mxu0 0.0
    %291 = vmatpush.msra.mxu0 0.0
    %292 = vmatpush.msra.mxu0 0.0
    %293 = vmatpush.msra.mxu0 0.0
    %294 = vmatpush.msra.mxu0 0.0
    %295 = vmatpush.msra.mxu0 0.0
    %296 = vmatpush.msra.mxu0 0.0
    %297 = vmatpush.msra.mxu0 %v281
    %298 = vmatpush.msra.mxu0 %v267
    %299 = vmatmul.f32.gmra.mxu0 %v274
    %v300 = vpop.f32.mrf.mxu0
    %v301 = vadd.f32 1e-16, %v300
    %302 = vmatmul.f32.gmra.mxu0 %v277
    %v303 = vpop.f32.mrf.mxu0
    %v304 = vadd.f32 1e-16, %v303
    %305 = vdwg.mxu0
    %v306 = vrcp.pop %v301
    %v307 = vmul.f32 %v301, %v306
    %v308 = vsub.f32 1.0, %v307
    %v309 = vmul.f32 %v306, %v308
    %v310 = vadd.f32 %v306, %v309
    %vm311 = vweird.f32 %v301
    %vm312 = vweird.f32 %v306
    %vm313 = vmor %vm311, %vm312
    %v314 = vsel %vm313, %v306, %v310
    %v315 = vand.u32 2147483647, %v301
    %vm316 = vcmp.eq.f32.partialorder %v315, 8.507059e+37
    %v317 = vand.u32 %v301, 2147483648
    %v318 = vor.u32 1.1754944e-38, %v317
    %v319 = vsel %vm316, %v318, %v314
    %v320 = vmul.f32 %v267, %v319
    %v321 = vrcp.pop %v304
    %v322 = vmul.f32 %v304, %v321
    %v323 = vsub.f32 1.0, %v322
    %v324 = vmul.f32 %v321, %v323
    %v325 = vadd.f32 %v321, %v324
    %vm326 = vweird.f32 %v304
    %vm327 = vweird.f32 %v321
    %vm328 = vmor %vm326, %vm327
    %v329 = vsel %vm328, %v321, %v325
    %v330 = vand.u32 2147483647, %v304
    %vm331 = vcmp.eq.f32.partialorder %v330, 8.507059e+37
    %v332 = vand.u32 %v304, 2147483648
    %v333 = vor.u32 1.1754944e-38, %v332
    %v334 = vsel %vm331, %v333, %v329
    %v335 = vmul.f32 %v269, %v334
    %v336 = vld [vmem:[#allocation2 + $0x80] sm:$0xff]
    %v337 = vld [vmem:[#allocation2 + $0x88] sm:$0x1f]
    %v338 = vmul.f32 %v320, %v185
    %v339 = vmul.f32 %v335, %v188
    %v341 = vsel %vm272, %v336, 0
    %v344 = vsel %vm272, %v337, 0
    %v347 = vsel %vm279, %v339, 0
    %349 = vmatpush.msra.mxu0 0.0
    %350 = vmatpush.msra.mxu0 0.0
    %351 = vmatpush.msra.mxu0 0.0
    %352 = vmatpush.msra.mxu0 0.0
    %353 = vmatpush.msra.mxu0 0.0
    %354 = vmatpush.msra.mxu0 0.0
    %355 = vmatpush.msra.mxu0 0.0
    %356 = vmatpush.msra.mxu0 0.0
    %357 = vmatpush.msra.mxu0 0.0
    %358 = vmatpush.msra.mxu0 0.0
    %359 = vmatpush.msra.mxu0 0.0
    %360 = vmatpush.msra.mxu0 0.0
    %361 = vmatpush.msra.mxu0 0.0
    %362 = vmatpush.msra.mxu0 0.0
    %363 = vmatpush.msra.mxu0 %v347
    %364 = vmatpush.msra.mxu0 %v338
    %365 = vmatmul.f32.gmra.mxu0 %v341
    %v366 = vpop.f32.mrf.mxu0
    %v367 = vadd.f32 0.0, %v366
    %368 = vmatmul.f32.gmra.mxu0 %v344
    %v369 = vpop.f32.mrf.mxu0
    %v370 = vadd.f32 0.0, %v369
    %371 = vdwg.mxu0
    %v372 = vmul.f32 %v320, %v367
    %v373 = vmul.f32 %v335, %v370
    %v374 = vld [vmem:[#allocation2 + $0x90] sm:$0xff]
    %v375 = vld [vmem:[#allocation2 + $0x98] sm:$0x1]
    %v376 = vperm.slane %v375, 0
    %v378 = vsel %vm29, %v203, 0
    %v381 = vsel %vm29, %v206, 0
    %383 = vmatpush.msra.mxu0 0.0
    %384 = vmatpush.msra.mxu0 0.0
    %385 = vmatpush.msra.mxu0 0.0
    %386 = vmatpush.msra.mxu0 0.0
    %387 = vmatpush.msra.mxu0 0.0
    %388 = vmatpush.msra.mxu0 0.0
    %389 = vmatpush.msra.mxu0 0.0
    %390 = vmatpush.msra.mxu0 0.0
    %391 = vmatpush.msra.mxu0 0.0
    %392 = vmatpush.msra.mxu0 0.0
    %393 = vmatpush.msra.mxu0 0.0
    %394 = vmatpush.msra.mxu0 0.0
    %395 = vmatpush.msra.mxu0 0.0
    %396 = vmatpush.msra.mxu0 0.0
    %397 = vmatpush.msra.mxu0 0.0
    %398 = vmatpush.msra.mxu0 %v374
    %399 = vmatmul.f32.gmra.mxu0 %v378
    %v400 = vpop.f32.mrf.mxu0
    %v401 = vadd.f32 %v376, %v400
    %402 = vmatmul.f32.gmra.mxu0 %v381
    %v403 = vpop.f32.mrf.mxu0
    %v404 = vadd.f32 %v376, %v403
    %405 = vdwg.mxu0
    %408 = vrot.lane.b32.xlu0 %v401, 124
    %v409 = vpop.permute.xlu0 %408
    %410 = vrot.lane.b32.xlu0 %v404, 124
    %v411 = vpop.permute.xlu0 %410
    %vm412 = vcmask 31744
    %v413 = vsel %vm412, %v401, 0
    %v415 = vsel %vm412, %v404, 0
    %v417 = vsel %vm412, %v409, 0
    %v419 = vsel %vm412, %v411, 0
    %421 = vmatpush.xpose.msra.mxu0 0.0
    %422 = vmatpush.xpose.msra.mxu0 0.0
    %423 = vmatpush.xpose.msra.mxu0 0.0
    %424 = vmatpush.xpose.msra.mxu0 0.0
    %425 = vmatpush.xpose.msra.mxu0 0.0
    %426 = vmatpush.xpose.msra.mxu0 0.0
    %427 = vmatpush.xpose.msra.mxu0 0.0
    %428 = vmatpush.xpose.msra.mxu0 0.0
    %429 = vmatpush.xpose.msra.mxu0 0.0
    %430 = vmatpush.xpose.msra.mxu0 0.0
    %431 = vmatpush.xpose.msra.mxu0 0.0
    %432 = vmatpush.xpose.msra.mxu0 0.0
    %433 = vmatpush.xpose.msra.mxu0 0.0
    %434 = vmatpush.xpose.msra.mxu0 0.0
    %435 = vmatpush.xpose.msra.mxu0 %v419
    %436 = vmatpush.xpose.msra.mxu0 %v417
    %437 = vmatmul.f32.gmra.mxu0 %v413
    %v438 = vpop.f32.mrf.mxu0
    %v439 = vadd.f32 0.0, %v438
    %440 = vmatmul.f32.gmra.mxu0 %v415
    %v441 = vpop.f32.mrf.mxu0
    %v442 = vadd.f32 0.0, %v441
    %443 = vdwg.mxu0
    %v444 = vmul.f32 %v439, 0.5
    %v445 = vmul.f32 %v442, 0.5
    %vm446 = vcmask 72704
    %v447 = vsel %vm446, %v444, -inf
    %448 = vmax.xlane.f32.xlu0 %v447
    %v449 = vpop.xlane.xlu0 %448
    %vm450 = vcmask 65536
    %v451 = vsel %vm450, %v445, -inf
    %452 = vmax.xlane.f32.xlu0 %v451
    %v453 = vpop.xlane.xlu0 %452
    %v454 = vsub.f32 %v444, %v449
    %v455 = vsub.f32 %v445, %v453
    %v456 = vmul.f32 %v454, 1.442695
    %v457 = vpow.pop %v456
    %v458 = vmul.f32 %v455, 1.442695
    %v459 = vpow.pop %v458
    %v460 = vsel %vm446, %v457, 0.0
    %461 = vadd.xlane.f32.xlu0 %v460
    %v462 = vpop.xlane.xlu0 %461
    %v463 = vsel %vm450, %v459, 0.0
    %464 = vadd.xlane.f32.xlu0 %v463
    %v465 = vpop.xlane.xlu0 %464
    %v466 = vrcp.pop %v462
    %v467 = vmul.f32 %v462, %v466
    %v468 = vsub.f32 1.0, %v467
    %v469 = vmul.f32 %v466, %v468
    %v470 = vadd.f32 %v466, %v469
    %vm471 = vweird.f32 %v462
    %vm472 = vweird.f32 %v466
    %vm473 = vmor %vm471, %vm472
    %v474 = vsel %vm473, %v466, %v470
    %v475 = vand.u32 2147483647, %v462
    %vm476 = vcmp.eq.f32.partialorder %v475, 8.507059e+37
    %v477 = vand.u32 %v462, 2147483648
    %v478 = vor.u32 1.1754944e-38, %v477
    %v479 = vsel %vm476, %v478, %v474
    %v480 = vmul.f32 %v457, %v479
    %v481 = vrcp.pop %v465
    %v482 = vmul.f32 %v465, %v481
    %v483 = vsub.f32 1.0, %v482
    %v484 = vmul.f32 %v481, %v483
    %v485 = vadd.f32 %v481, %v484
    %vm486 = vweird.f32 %v465
    %vm487 = vweird.f32 %v481
    %vm488 = vmor %vm486, %vm487
    %v489 = vsel %vm488, %v481, %v485
    %v490 = vand.u32 2147483647, %v465
    %vm491 = vcmp.eq.f32.partialorder %v490, 8.507059e+37
    %v492 = vand.u32 %v465, 2147483648
    %v493 = vor.u32 1.1754944e-38, %v492
    %v494 = vsel %vm491, %v493, %v489
    %v495 = vmul.f32 %v459, %v494
    %496 = vrot.lane.b32.xlu0 %v401, 120
    %v497 = vpop.permute.xlu0 %496
    %498 = vrot.lane.b32.xlu0 %v404, 120
    %v499 = vpop.permute.xlu0 %498
    %v502 = vsel %vm446, %v480, 0
    %v505 = vsel %vm446, %v495, 0
    %vm507 = vcmask 1040384
    %v508 = vsel %vm507, %v499, 0
    %510 = vmatpush.msra.mxu0 0.0
    %511 = vmatpush.msra.mxu0 0.0
    %512 = vmatpush.msra.mxu0 0.0
    %513 = vmatpush.msra.mxu0 0.0
    %514 = vmatpush.msra.mxu0 0.0
    %515 = vmatpush.msra.mxu0 0.0
    %516 = vmatpush.msra.mxu0 0.0
    %517 = vmatpush.msra.mxu0 0.0
    %518 = vmatpush.msra.mxu0 0.0
    %519 = vmatpush.msra.mxu0 0.0
    %520 = vmatpush.msra.mxu0 0.0
    %521 = vmatpush.msra.mxu0 0.0
    %522 = vmatpush.msra.mxu0 0.0
    %523 = vmatpush.msra.mxu0 0.0
    %524 = vmatpush.msra.mxu0 %v508
    %525 = vmatpush.msra.mxu0 %v497
    %526 = vmatmul.f32.gmra.mxu0 %v502
    %v527 = vpop.f32.mrf.mxu0
    %v528 = vadd.f32 0.0, %v527
    %529 = vmatmul.f32.gmra.mxu0 %v505
    %v530 = vpop.f32.mrf.mxu0
    %v531 = vadd.f32 0.0, %v530
    %532 = vdwg.mxu0
    %533 = vrot.lane.b32.xlu0 %v401, 116
    %v534 = vpop.permute.xlu0 %533
    %535 = vrot.lane.b32.xlu0 %v404, 116
    %v536 = vpop.permute.xlu0 %535
    %537 = vrot.lane.b32.xlu0 %v401, 112
    %v538 = vpop.permute.xlu0 %537
    %539 = vrot.lane.b32.xlu0 %v404, 112
    %v540 = vpop.permute.xlu0 %539
    %v541 = vsel %vm412, %v534, 0
    %v543 = vsel %vm412, %v536, 0
    %v545 = vsel %vm412, %v538, 0
    %v547 = vsel %vm412, %v540, 0
    %549 = vmatpush.xpose.msra.mxu0 0.0
    %550 = vmatpush.xpose.msra.mxu0 0.0
    %551 = vmatpush.xpose.msra.mxu0 0.0
    %552 = vmatpush.xpose.msra.mxu0 0.0
    %553 = vmatpush.xpose.msra.mxu0 0.0
    %554 = vmatpush.xpose.msra.mxu0 0.0
    %555 = vmatpush.xpose.msra.mxu0 0.0
    %556 = vmatpush.xpose.msra.mxu0 0.0
    %557 = vmatpush.xpose.msra.mxu0 0.0
    %558 = vmatpush.xpose.msra.mxu0 0.0
    %559 = vmatpush.xpose.msra.mxu0 0.0
    %560 = vmatpush.xpose.msra.mxu0 0.0
    %561 = vmatpush.xpose.msra.mxu0 0.0
    %562 = vmatpush.xpose.msra.mxu0 0.0
    %563 = vmatpush.xpose.msra.mxu0 %v547
    %564 = vmatpush.xpose.msra.mxu0 %v545
    %565 = vmatmul.f32.gmra.mxu0 %v541
    %v566 = vpop.f32.mrf.mxu0
    %v567 = vadd.f32 0.0, %v566
    %568 = vmatmul.f32.gmra.mxu0 %v543
    %v569 = vpop.f32.mrf.mxu0
    %v570 = vadd.f32 0.0, %v569
    %571 = vdwg.mxu0
    %v572 = vmul.f32 %v567, 0.5
    %v573 = vmul.f32 %v570, 0.5
    %v574 = vsel %vm446, %v572, -inf
    %575 = vmax.xlane.f32.xlu0 %v574
    %v576 = vpop.xlane.xlu0 %575
    %v577 = vsel %vm450, %v573, -inf
    %578 = vmax.xlane.f32.xlu0 %v577
    %v579 = vpop.xlane.xlu0 %578
    %v580 = vsub.f32 %v572, %v576
    %v581 = vsub.f32 %v573, %v579
    %v582 = vmul.f32 %v580, 1.442695
    %v583 = vpow.pop %v582
    %v584 = vmul.f32 %v581, 1.442695
    %v585 = vpow.pop %v584
    %v586 = vsel %vm446, %v583, 0.0
    %587 = vadd.xlane.f32.xlu0 %v586
    %v588 = vpop.xlane.xlu0 %587
    %v589 = vsel %vm450, %v585, 0.0
    %590 = vadd.xlane.f32.xlu0 %v589
    %v591 = vpop.xlane.xlu0 %590
    %v592 = vrcp.pop %v588
    %v593 = vmul.f32 %v588, %v592
    %v594 = vsub.f32 1.0, %v593
    %v595 = vmul.f32 %v592, %v594
    %v596 = vadd.f32 %v592, %v595
    %vm597 = vweird.f32 %v588
    %vm598 = vweird.f32 %v592
    %vm599 = vmor %vm597, %vm598
    %v600 = vsel %vm599, %v592, %v596
    %v601 = vand.u32 2147483647, %v588
    %vm602 = vcmp.eq.f32.partialorder %v601, 8.507059e+37
    %v603 = vand.u32 %v588, 2147483648
    %v604 = vor.u32 1.1754944e-38, %v603
    %v605 = vsel %vm602, %v604, %v600
    %v606 = vmul.f32 %v583, %v605
    %v607 = vrcp.pop %v591
    %v608 = vmul.f32 %v591, %v607
    %v609 = vsub.f32 1.0, %v608
    %v610 = vmul.f32 %v607, %v609
    %v611 = vadd.f32 %v607, %v610
    %vm612 = vweird.f32 %v591
    %vm613 = vweird.f32 %v607
    %vm614 = vmor %vm612, %vm613
    %v615 = vsel %vm614, %v607, %v611
    %v616 = vand.u32 2147483647, %v591
    %vm617 = vcmp.eq.f32.partialorder %v616, 8.507059e+37
    %v618 = vand.u32 %v591, 2147483648
    %v619 = vor.u32 1.1754944e-38, %v618
    %v620 = vsel %vm617, %v619, %v615
    %v621 = vmul.f32 %v585, %v620
    %622 = vrot.lane.b32.xlu0 %v401, 108
    %v623 = vpop.permute.xlu0 %622
    %624 = vrot.lane.b32.xlu0 %v404, 108
    %v625 = vpop.permute.xlu0 %624
    %v628 = vsel %vm446, %v606, 0
    %v631 = vsel %vm446, %v621, 0
    %v633 = vsel %vm507, %v625, 0
    %635 = vmatpush.msra.mxu0 0.0
    %636 = vmatpush.msra.mxu0 0.0
    %637 = vmatpush.msra.mxu0 0.0
    %638 = vmatpush.msra.mxu0 0.0
    %639 = vmatpush.msra.mxu0 0.0
    %640 = vmatpush.msra.mxu0 0.0
    %641 = vmatpush.msra.mxu0 0.0
    %642 = vmatpush.msra.mxu0 0.0
    %643 = vmatpush.msra.mxu0 0.0
    %644 = vmatpush.msra.mxu0 0.0
    %645 = vmatpush.msra.mxu0 0.0
    %646 = vmatpush.msra.mxu0 0.0
    %647 = vmatpush.msra.mxu0 0.0
    %648 = vmatpush.msra.mxu0 0.0
    %649 = vmatpush.msra.mxu0 %v633
    %650 = vmatpush.msra.mxu0 %v623
    %651 = vmatmul.f32.gmra.mxu0 %v628
    %v652 = vpop.f32.mrf.mxu0
    %v653 = vadd.f32 0.0, %v652
    %654 = vmatmul.f32.gmra.mxu0 %v631
    %v655 = vpop.f32.mrf.mxu0
    %v656 = vadd.f32 0.0, %v655
    %657 = vdwg.mxu0
    %660 = vrot.lane.b32.xlu0 %v653, 4
    %v661 = vpop.permute.xlu0 %660
    %662 = vrot.lane.b32.xlu0 %v656, 4
    %v663 = vpop.permute.xlu0 %662
    %v666 = vsel %vm412, %v528, %v661
    %v667 = vsel %vm412, %v531, %v663
    %v670 = vrot.slane %v666, 3
    %v671 = vrot.slane %v667, 3
    %v672 = vsel %vm279, %v670, %v671
    %v674 = vsel %vm279, %v373, %v670
    %v675 = vld [vmem:[#allocation2 + $0xa0] sm:$0xff]
    %v676 = vld [vmem:[#allocation2 + $0xa8] sm:$0xff]
    %vm677 = vcmask 310272
    %v679 = vsel %vm677, %v675, 0
    %vm681 = vcmask 1045504
    %v682 = vsel %vm681, %v672, 0
    %684 = vmatpush.msra.mxu0 0.0
    %685 = vmatpush.msra.mxu0 0.0
    %686 = vmatpush.msra.mxu0 0.0
    %687 = vmatpush.msra.mxu0 0.0
    %688 = vmatpush.msra.mxu0 0.0
    %689 = vmatpush.msra.mxu0 0.0
    %690 = vmatpush.msra.mxu0 0.0
    %691 = vmatpush.msra.mxu0 0.0
    %692 = vmatpush.msra.mxu0 0.0
    %693 = vmatpush.msra.mxu0 0.0
    %694 = vmatpush.msra.mxu0 0.0
    %695 = vmatpush.msra.mxu0 %v682
    %696 = vmatpush.msra.mxu0 %v674
    %697 = vmatpush.msra.mxu0 %v372
    %698 = vmatpush.msra.mxu0 %v89
    %699 = vmatpush.msra.mxu0 %v88
    %700 = vmatmul.f32.gmra.mxu0 %v679
    %v701 = vpop.f32.mrf.mxu0
    %v702 = vadd.f32 %v676, %v701
    %703 = vdwg.mxu0
    %v704 = vmul.f32 %v702, %v73
    %v705 = vadd.f32 %v704, %v46
    %706 = vst.msk [vmem:[%s2] sm:$0xff] %vm29, %v705
    %v707 = vsub.f32 %v185, %v191
    %v708 = vsub.f32 %v188, %v194
    %v709 = vld [vmem:[#allocation2 + $0xb0] sm:$0x7]
    %v711 = vsel %vm272, %v709, 0
    %v714 = vsel %vm279, %v708, 0
    %716 = vmatpush.msra.mxu0 0.0
    %717 = vmatpush.msra.mxu0 0.0
    %718 = vmatpush.msra.mxu0 0.0
    %719 = vmatpush.msra.mxu0 0.0
    %720 = vmatpush.msra.mxu0 0.0
    %721 = vmatpush.msra.mxu0 0.0
    %722 = vmatpush.msra.mxu0 0.0
    %723 = vmatpush.msra.mxu0 0.0
    %724 = vmatpush.msra.mxu0 0.0
    %725 = vmatpush.msra.mxu0 0.0
    %726 = vmatpush.msra.mxu0 0.0
    %727 = vmatpush.msra.mxu0 0.0
    %728 = vmatpush.msra.mxu0 0.0
    %729 = vmatpush.msra.mxu0 0.0
    %730 = vmatpush.msra.mxu0 %v714
    %731 = vmatpush.msra.mxu0 %v707
    %732 = vmatmul.f32.gmra.mxu0 %v711
    %v733 = vpop.f32.mrf.mxu0
    %v734 = vadd.f32 0.0, %v733
    %735 = vdwg.mxu0
    %vm736 = vcmask 59392
    %v737 = vsel %vm736, %v734, 0.0
    %738 = vadd.xlane.f32.xlu0 %v737
    %v739 = vpop.xlane.xlu0 %738
    %v740 = vand.u32 2147483647, %v739
    %vm741 = vcmask 1042432
    %v742 = vsel %vm741, %v740, 0.0
    %v743 = vrot.slane %v742, 4
    %v744 = vadd.f32 %v742, %v743
    %v745 = vrot.slane %v744, 2
    %v746 = vadd.f32 %v744, %v745
    %v747 = vrot.slane %v746, 1
    %v748 = vadd.f32 %v746, %v747
    %v749 = vld [vmem:[#allocation2 + $0xc8] sm:$0xff]
    %v750 = vld [vmem:[#allocation2 + $0xd0] sm:$0x1]
    %v752 = vsel %vm412, %v197, 0
    %v755 = vsel %vm412, %v200, 0
    %757 = vmatpush.xpose.msra.mxu0 0.0
    %758 = vmatpush.xpose.msra.mxu0 0.0
    %759 = vmatpush.xpose.msra.mxu0 0.0
    %760 = vmatpush.xpose.msra.mxu0 0.0
    %761 = vmatpush.xpose.msra.mxu0 0.0
    %762 = vmatpush.xpose.msra.mxu0 0.0
    %763 = vmatpush.xpose.msra.mxu0 0.0
    %764 = vmatpush.xpose.msra.mxu0 0.0
    %765 = vmatpush.xpose.msra.mxu0 0.0
    %766 = vmatpush.xpose.msra.mxu0 0.0
    %767 = vmatpush.xpose.msra.mxu0 0.0
    %768 = vmatpush.xpose.msra.mxu0 0.0
    %769 = vmatpush.xpose.msra.mxu0 0.0
    %770 = vmatpush.xpose.msra.mxu0 0.0
    %771 = vmatpush.xpose.msra.mxu0 %v755
    %772 = vmatpush.xpose.msra.mxu0 %v752
    %773 = vmatmul.f32.gmra.mxu0 %v752
    %v774 = vpop.f32.mrf.mxu0
    %v775 = vadd.f32 0.0, %v774
    %776 = vmatmul.f32.gmra.mxu0 %v755
    %v777 = vpop.f32.mrf.mxu0
    %v778 = vadd.f32 0.0, %v777
    %779 = vdwg.mxu0
    %v780 = vmul.f32 %v775, %v749
    %v781 = vmul.f32 %v778, %v750
    %v782 = vsel %vm446, %v780, 0.0
    %783 = vadd.xlane.f32.xlu0 %v782
    %v784 = vpop.xlane.xlu0 %783
    %v785 = vsel %vm450, %v781, 0.0
    %786 = vadd.xlane.f32.xlu0 %v785
    %v787 = vpop.xlane.xlu0 %786
    %v788 = vadd.f32 %v782, %v785
    %v789 = vrot.slane %v788, 4
    %v790 = vadd.f32 %v788, %v789
    %v791 = vrot.slane %v790, 2
    %v792 = vadd.f32 %v790, %v791
    %v793 = vrot.slane %v792, 1
    %v794 = vadd.f32 %v792, %v793
    %v795 = vmul.f32 %v784, %v794
    %v796 = vmul.f32 %v787, %v794
    %v797 = vrsqrt.pop %v795
    %v798 = vmul.f32 %v797, %v795
    %v799 = vmul.f32 %v798, %v797
    %v800 = vmul.f32 0.5, %v799
    %v801 = vsub.f32 1.5, %v800
    %v802 = vmul.f32 %v797, %v801
    %v803 = vmul.f32 %v795, %v802
    %vm804 = vcmp.eq.f32.partialorder %v795, inf
    %v805 = vsel %vm804, %v795, %v803
    %vm806 = vcmp.eq.f32.partialorder %v795, 0.0
    %v807 = vand.u32 %v795, 2147483648
    %v808 = vsel %vm806, %v807, %v805
    %v809 = vrsqrt.pop %v796
    %v810 = vmul.f32 %v809, %v796
    %v811 = vmul.f32 %v810, %v809
    %v812 = vmul.f32 0.5, %v811
    %v813 = vsub.f32 1.5, %v812
    %v814 = vmul.f32 %v809, %v813
    %v815 = vmul.f32 %v796, %v814
    %vm816 = vcmp.eq.f32.partialorder %v796, inf
    %v817 = vsel %vm816, %v796, %v815
    %vm818 = vcmp.eq.f32.partialorder %v796, 0.0
    %v819 = vand.u32 %v796, 2147483648
    %v820 = vsel %vm818, %v819, %v817
    %v821 = vadd.f32 %v784, %v794
    %v822 = vadd.f32 %v787, %v794
    %v823 = vmul.f32 %v775, 2.0
    %v824 = vmul.f32 %v778, 2.0
    %v825 = vsub.f32 %v821, %v823
    %v826 = vsub.f32 %v822, %v824
    %v827 = vmax.f32 %v825, 0.0
    %v828 = vmax.f32 %v826, 0.0
    %v829 = vrsqrt.pop %v827
    %v830 = vmul.f32 %v829, %v827
    %v831 = vmul.f32 %v830, %v829
    %v832 = vmul.f32 0.5, %v831
    %v833 = vsub.f32 1.5, %v832
    %v834 = vmul.f32 %v829, %v833
    %v835 = vmul.f32 %v827, %v834
    %vm836 = vcmp.eq.f32.partialorder %v827, inf
    %v837 = vsel %vm836, %v827, %v835
    %vm838 = vcmp.eq.f32.partialorder %v827, 0.0
    %v839 = vand.u32 %v827, 2147483648
    %v840 = vsel %vm838, %v839, %v837
    %v841 = vrsqrt.pop %v828
    %v842 = vmul.f32 %v841, %v828
    %v843 = vmul.f32 %v842, %v841
    %v844 = vmul.f32 0.5, %v843
    %v845 = vsub.f32 1.5, %v844
    %v846 = vmul.f32 %v841, %v845
    %v847 = vmul.f32 %v828, %v846
    %vm848 = vcmp.eq.f32.partialorder %v828, inf
    %v849 = vsel %vm848, %v828, %v847
    %vm850 = vcmp.eq.f32.partialorder %v828, 0.0
    %v851 = vand.u32 %v828, 2147483648
    %v852 = vsel %vm850, %v851, %v849
    %v853 = vadd.f32 %v808, 1e-16
    %v854 = vadd.f32 %v820, 1e-16
    %v855 = vrcp.pop %v853
    %v856 = vmul.f32 %v853, %v855
    %v857 = vsub.f32 1.0, %v856
    %v858 = vmul.f32 %v855, %v857
    %v859 = vadd.f32 %v855, %v858
    %vm860 = vweird.f32 %v853
    %vm861 = vweird.f32 %v855
    %vm862 = vmor %vm860, %vm861
    %v863 = vsel %vm862, %v855, %v859
    %v864 = vand.u32 2147483647, %v853
    %vm865 = vcmp.eq.f32.partialorder %v864, 8.507059e+37
    %v866 = vand.u32 %v853, 2147483648
    %v867 = vor.u32 1.1754944e-38, %v866
    %v868 = vsel %vm865, %v867, %v863
    %v869 = vmul.f32 %v775, %v868
    %v870 = vrcp.pop %v854
    %v871 = vmul.f32 %v854, %v870
    %v872 = vsub.f32 1.0, %v871
    %v873 = vmul.f32 %v870, %v872
    %v874 = vadd.f32 %v870, %v873
    %vm875 = vweird.f32 %v854
    %vm876 = vweird.f32 %v870
    %vm877 = vmor %vm875, %vm876
    %v878 = vsel %vm877, %v870, %v874
    %v879 = vand.u32 2147483647, %v854
    %vm880 = vcmp.eq.f32.partialorder %v879, 8.507059e+37
    %v881 = vand.u32 %v854, 2147483648
    %v882 = vor.u32 1.1754944e-38, %v881
    %v883 = vsel %vm880, %v882, %v878
    %v884 = vmul.f32 %v778, %v883
    %v885 = vmul.f32 %v869, %v840
    %v886 = vmul.f32 %v884, %v852
    %v887 = vsub.f32 1.0, %v869
    %v888 = vsub.f32 1.0, %v884
    %v889 = vsub.f32 4.2, %v840
    %v890 = vsub.f32 4.2, %v852
    %v891 = vmax.f32 %v889, 0.0
    %v892 = vmax.f32 %v890, 0.0
    %v893 = vmul.f32 %v887, %v891
    %v894 = vmul.f32 %v888, %v892
    %v895 = vadd.f32 %v885, %v893
    %v896 = vadd.f32 %v886, %v894
    %897 = vrot.lane.b32.xlu0 %v197, 124
    %v898 = vpop.permute.xlu0 %897
    %899 = vrot.lane.b32.xlu0 %v200, 124
    %v900 = vpop.permute.xlu0 %899
    %v901 = vsel %vm412, %v898, 0
    %v903 = vsel %vm412, %v900, 0
    %905 = vmatpush.xpose.msra.mxu0 0.0
    %906 = vmatpush.xpose.msra.mxu0 0.0
    %907 = vmatpush.xpose.msra.mxu0 0.0
    %908 = vmatpush.xpose.msra.mxu0 0.0
    %909 = vmatpush.xpose.msra.mxu0 0.0
    %910 = vmatpush.xpose.msra.mxu0 0.0
    %911 = vmatpush.xpose.msra.mxu0 0.0
    %912 = vmatpush.xpose.msra.mxu0 0.0
    %913 = vmatpush.xpose.msra.mxu0 0.0
    %914 = vmatpush.xpose.msra.mxu0 0.0
    %915 = vmatpush.xpose.msra.mxu0 0.0
    %916 = vmatpush.xpose.msra.mxu0 0.0
    %917 = vmatpush.xpose.msra.mxu0 0.0
    %918 = vmatpush.xpose.msra.mxu0 0.0
    %919 = vmatpush.xpose.msra.mxu0 %v903
    %920 = vmatpush.xpose.msra.mxu0 %v901
    %921 = vmatmul.f32.gmra.mxu0 %v901
    %v922 = vpop.f32.mrf.mxu0
    %v923 = vadd.f32 0.0, %v922
    %924 = vmatmul.f32.gmra.mxu0 %v903
    %v925 = vpop.f32.mrf.mxu0
    %v926 = vadd.f32 0.0, %v925
    %927 = vdwg.mxu0
    %v928 = vmul.f32 %v923, %v749
    %v929 = vmul.f32 %v926, %v750
    %v930 = vsel %vm446, %v928, 0.0
    %931 = vadd.xlane.f32.xlu0 %v930
    %v932 = vpop.xlane.xlu0 %931
    %v933 = vsel %vm450, %v929, 0.0
    %934 = vadd.xlane.f32.xlu0 %v933
    %v935 = vpop.xlane.xlu0 %934
    %v936 = vadd.f32 %v930, %v933
    %v937 = vrot.slane %v936, 4
    %v938 = vadd.f32 %v936, %v937
    %v939 = vrot.slane %v938, 2
    %v940 = vadd.f32 %v938, %v939
    %v941 = vrot.slane %v940, 1
    %v942 = vadd.f32 %v940, %v941
    %v943 = vmul.f32 %v932, %v942
    %v944 = vmul.f32 %v935, %v942
    %v945 = vrsqrt.pop %v943
    %v946 = vmul.f32 %v945, %v943
    %v947 = vmul.f32 %v946, %v945
    %v948 = vmul.f32 0.5, %v947
    %v949 = vsub.f32 1.5, %v948
    %v950 = vmul.f32 %v945, %v949
    %v951 = vmul.f32 %v943, %v950
    %vm952 = vcmp.eq.f32.partialorder %v943, inf
    %v953 = vsel %vm952, %v943, %v951
    %vm954 = vcmp.eq.f32.partialorder %v943, 0.0
    %v955 = vand.u32 %v943, 2147483648
    %v956 = vsel %vm954, %v955, %v953
    %v957 = vrsqrt.pop %v944
    %v958 = vmul.f32 %v957, %v944
    %v959 = vmul.f32 %v958, %v957
    %v960 = vmul.f32 0.5, %v959
    %v961 = vsub.f32 1.5, %v960
    %v962 = vmul.f32 %v957, %v961
    %v963 = vmul.f32 %v944, %v962
    %vm964 = vcmp.eq.f32.partialorder %v944, inf
    %v965 = vsel %vm964, %v944, %v963
    %vm966 = vcmp.eq.f32.partialorder %v944, 0.0
    %v967 = vand.u32 %v944, 2147483648
    %v968 = vsel %vm966, %v967, %v965
    %v969 = vadd.f32 %v932, %v942
    %v970 = vadd.f32 %v935, %v942
    %v971 = vmul.f32 %v923, 2.0
    %v972 = vmul.f32 %v926, 2.0
    %v973 = vsub.f32 %v969, %v971
    %v974 = vsub.f32 %v970, %v972
    %v975 = vmax.f32 %v973, 0.0
    %v976 = vmax.f32 %v974, 0.0
    %v977 = vrsqrt.pop %v975
    %v978 = vmul.f32 %v977, %v975
    %v979 = vmul.f32 %v978, %v977
    %v980 = vmul.f32 0.5, %v979
    %v981 = vsub.f32 1.5, %v980
    %v982 = vmul.f32 %v977, %v981
    %v983 = vmul.f32 %v975, %v982
    %vm984 = vcmp.eq.f32.partialorder %v975, inf
    %v985 = vsel %vm984, %v975, %v983
    %vm986 = vcmp.eq.f32.partialorder %v975, 0.0
    %v987 = vand.u32 %v975, 2147483648
    %v988 = vsel %vm986, %v987, %v985
    %v989 = vrsqrt.pop %v976
    %v990 = vmul.f32 %v989, %v976
    %v991 = vmul.f32 %v990, %v989
    %v992 = vmul.f32 0.5, %v991
    %v993 = vsub.f32 1.5, %v992
    %v994 = vmul.f32 %v989, %v993
    %v995 = vmul.f32 %v976, %v994
    %vm996 = vcmp.eq.f32.partialorder %v976, inf
    %v997 = vsel %vm996, %v976, %v995
    %vm998 = vcmp.eq.f32.partialorder %v976, 0.0
    %v999 = vand.u32 %v976, 2147483648
    %v1000 = vsel %vm998, %v999, %v997
    %v1001 = vadd.f32 %v956, 1e-16
    %v1002 = vadd.f32 %v968, 1e-16
    %v1003 = vrcp.pop %v1001
    %v1004 = vmul.f32 %v1001, %v1003
    %v1005 = vsub.f32 1.0, %v1004
    %v1006 = vmul.f32 %v1003, %v1005
    %v1007 = vadd.f32 %v1003, %v1006
    %vm1008 = vweird.f32 %v1001
    %vm1009 = vweird.f32 %v1003
    %vm1010 = vmor %vm1008, %vm1009
    %v1011 = vsel %vm1010, %v1003, %v1007
    %v1012 = vand.u32 2147483647, %v1001
    %vm1013 = vcmp.eq.f32.partialorder %v1012, 8.507059e+37
    %v1014 = vand.u32 %v1001, 2147483648
    %v1015 = vor.u32 1.1754944e-38, %v1014
    %v1016 = vsel %vm1013, %v1015, %v1011
    %v1017 = vmul.f32 %v923, %v1016
    %v1018 = vrcp.pop %v1002
    %v1019 = vmul.f32 %v1002, %v1018
    %v1020 = vsub.f32 1.0, %v1019
    %v1021 = vmul.f32 %v1018, %v1020
    %v1022 = vadd.f32 %v1018, %v1021
    %vm1023 = vweird.f32 %v1002
    %vm1024 = vweird.f32 %v1018
    %vm1025 = vmor %vm1023, %vm1024
    %v1026 = vsel %vm1025, %v1018, %v1022
    %v1027 = vand.u32 2147483647, %v1002
    %vm1028 = vcmp.eq.f32.partialorder %v1027, 8.507059e+37
    %v1029 = vand.u32 %v1002, 2147483648
    %v1030 = vor.u32 1.1754944e-38, %v1029
    %v1031 = vsel %vm1028, %v1030, %v1026
    %v1032 = vmul.f32 %v926, %v1031
    %v1033 = vmul.f32 %v1017, %v988
    %v1034 = vmul.f32 %v1032, %v1000
    %v1035 = vsub.f32 1.0, %v1017
    %v1036 = vsub.f32 1.0, %v1032
    %v1037 = vsub.f32 4.2, %v988
    %v1038 = vsub.f32 4.2, %v1000
    %v1039 = vmax.f32 %v1037, 0.0
    %v1040 = vmax.f32 %v1038, 0.0
    %v1041 = vmul.f32 %v1035, %v1039
    %v1042 = vmul.f32 %v1036, %v1040
    %v1043 = vadd.f32 %v1033, %v1041
    %v1044 = vadd.f32 %v1034, %v1042
    %v1045 = vadd.f32 %v895, %v1043
    %v1046 = vadd.f32 %v896, %v1044
    %v1047 = vmul.f32 %v1045, 0.5
    %v1048 = vmul.f32 %v1046, 0.5
    %v1049 = vld [vmem:[#allocation2 + $0xb8] sm:$0xff]
    %v1050 = vld [vmem:[#allocation2 + $0xc0] sm:$0x1]
    %v1051 = vand.u32 2147483647, %v1047
    %v1052 = vand.u32 2147483647, %v1048
    %v1053 = vmul.f32 %v1049, %v1051
    %v1054 = vmul.f32 %v1050, %v1052
    %v1055 = vsel %vm446, %v1053, 0.0
    %1056 = vadd.xlane.f32.xlu0 %v1055
    %v1057 = vpop.xlane.xlu0 %1056
    %v1058 = vsel %vm450, %v1054, 0.0
    %1059 = vadd.xlane.f32.xlu0 %v1058
    %v1060 = vpop.xlane.xlu0 %1059
    %v1061 = vsel %vm507, %v1060, 0.0
    %v1062 = vadd.f32 %v1057, %v1061
    %v1063 = vrot.slane %v1062, 4
    %v1064 = vadd.f32 %v1062, %v1063
    %v1065 = vrot.slane %v1064, 2
    %v1066 = vadd.f32 %v1064, %v1065
    %v1067 = vrot.slane %v1066, 1
    %v1068 = vadd.f32 %v1066, %v1067
    %v1069 = vadd.f32 %v748, %v1068
    %v1070 = vand.u32 2147483647, %v1069
    %vm1071 = vcmask 57344
    %1072 = vst.msk [vmem:[%s2 + $0x8] sm:$0x1] %vm1071, %v1070
    // Predicated region
    $region14: #{_forward.1} parent=1 // pred_check
      _
    $region15: #{_forward.1} parent=1 // pred_check_branch
      %1074 = sbr.rel (0) target = $region17
    $region16: #{_forward.1} parent=1 // pred_region
      _
    $region17: #{_forward.1} parent=1 // pred_fallthru
      _
    // Predicated region
    $region18: #{_forward.1} parent=1 // pred_check
      _
    $region19: #{_forward.1} parent=1 // pred_check_branch
      %1076 = sbr.rel (0) target = $region21
    $region20: #{_forward.1} parent=1 // pred_region
      _
    $region21: #{_forward.1} parent=1 // pred_fallthru
      _
    %1077 = vsyncpa [#allocation3], 1

</llo_original>
